<compile_context>
chip_gen: v7x
topology: tpu7x:2x2x1
jax: 0.10.0
libtpu: 0.0.40
codegen_flags: <defaults>
</compile_context>

<pallas_src>
import numpy as np
import jax
import jax.numpy as jnp
from jax import lax
from jax.experimental import pallas as pl
from jax.experimental.pallas import tpu as pltpu


def _round_up(x, m):
    return ((x + m - 1) // m) * m


def _net_kernel(x_ref, w1b_ref, b1_ref, w2b_ref, b2_ref,
                w3_ref, b3_ref, w4_ref, b4_ref, out_ref):
    f32 = jnp.float32
    bf16 = jnp.bfloat16
    B = x_ref.shape[1]                      # batch tile (sublane dim)

    # ---- conv1: one MXU dot, K = 140 (5 H-taps x 28 W, im2col'd in wrapper) ----
    # Output column layout: lanes [0:120)   = even output cols (jp*10 + o),
    #                       lanes [128:248) = odd  output cols.
    lhs1 = x_ref[...].reshape(24 * B, 140)                               # bf16
    y1 = jnp.dot(lhs1, w1b_ref[...], preferred_element_type=f32)        # (24B,256)
    # maxpool over W: aligned lane-tile max (even block vs odd block)
    pw = jnp.maximum(y1[:, :128], y1[:, 128:])                          # (24B,128)
    # maxpool over H: free leading-dim split, then bias + relu
    pw = pw.reshape(12, 2, B, 128)
    p1 = jnp.maximum(jnp.maximum(pw[:, 0], pw[:, 1]) + b1_ref[...], 0.0)  # (12,B,128)
    # p1 lanes: [jw*10 + c] for jw in 0..11, c in 0..9 (pad lanes are 0)

    # ---- conv2: lane-aligned K-concat of 5 H-taps -> one K=640 MXU dot ----
    # TODO(synk): nn.Dropout2d is identity in eval mode; training RNG not done.
    p1b = p1.astype(bf16)
    lhs2 = jnp.concatenate([p1b[di:di + 8] for di in range(5)], axis=-1)  # (8,B,640)
    lhs2 = lhs2.reshape(8 * B, 640)
    y2 = jnp.dot(lhs2, w2b_ref[...], preferred_element_type=f32)          # (8B,256)
    pw2 = jnp.maximum(y2[:, :128], y2[:, 128:]).reshape(4, 2, B, 128)
    p2 = jnp.maximum(jnp.maximum(pw2[:, 0], pw2[:, 1]) + b2_ref[...], 0.0)  # (4,B,128)
    # p2 lanes: [jp2*20 + o2] (pad lanes are 0); leading dim = pooled H (4)

    # ---- fc1: 320 -> 50 (padded to 128 lanes) as one (B,512)@(512,128) dot ----
    # Flatten order (PyTorch NCHW view(-1,320)) is baked into w3's packing.
    # TODO(synk): F.dropout(training=True) RNG path not implemented (eval id).
    h_in = jnp.concatenate([p2[ip] for ip in range(4)], axis=-1)          # (B,512)
    h1 = jnp.maximum(
        jnp.dot(h_in, w3_ref[...], preferred_element_type=f32) + b3_ref[...], 0.0)

    # ---- fc2: 50 -> 10 (padded to 128 lanes) + softmax over classes ----
    # Pad-lane bias is -1e30 (and w4 pad rows/cols are exactly 0) so exp() of
    # pad lanes is exactly 0.
    logits = jnp.dot(h1, w4_ref[...], preferred_element_type=f32) + b4_ref[...]
    m = jnp.max(logits, axis=-1, keepdims=True)
    e = jnp.exp(logits - m)
    s = jnp.sum(e, axis=-1, keepdims=True)
    out_ref[...] = (e * pl.reciprocal(s, approx=False)).astype(out_ref.dtype)


def _pack_weights(params):
    """Repack PyTorch-layout weights into K-folded, lane-friendly 2-D forms."""
    f32 = jnp.float32
    bf16 = jnp.bfloat16
    w1 = params['conv1_w'].astype(f32)      # (10,1,5,5)  (o, c, di, dj)
    b1 = params['conv1_b'].astype(f32)      # (10,)
    w2 = params['conv2_w'].astype(f32)      # (20,10,5,5) (o2, c, di, dj)
    b2 = params['conv2_b'].astype(f32)      # (20,)
    fw1 = params['fc1_w'].astype(f32)       # (50,320)
    fb1 = params['fc1_b'].astype(f32)       # (50,)
    fw2 = params['fc2_w'].astype(f32)       # (10,50)
    fb2 = params['fc2_b'].astype(f32)       # (10,)

    # conv1 band: (140, 256).  K row = di*28 + (j+dj), col = par*128 + jp*10 + o
    # where output column j = 2*jp + par.
    di, o, dj, jp, par = (a.ravel() for a in np.indices((5, 10, 5, 12, 2)))
    row = di * 28 + 2 * jp + par + dj
    col = par * 128 + jp * 10 + o
    band1 = jnp.zeros((140, 256), f32).at[row, col].set(w1[o, 0, di, dj]).astype(bf16)
    o, jp = (a.ravel() for a in np.indices((10, 12)))
    bias1 = jnp.zeros((1, 128), f32).at[0, jp * 10 + o].set(b1[o])

    # conv2 band: (640, 256).  K row = di*128 + (jw*10 + c) indexes p1 lanes.
    di, o2, c, dj, jp2, par = (a.ravel() for a in np.indices((5, 20, 10, 5, 4, 2)))
    jw = 2 * jp2 + par + dj
    row = di * 128 + jw * 10 + c
    col = par * 128 + jp2 * 20 + o2
    band2 = jnp.zeros((640, 256), f32).at[row, col].set(w2[o2, c, di, dj]).astype(bf16)
    o2, jp2 = (a.ravel() for a in np.indices((20, 4)))
    bias2 = jnp.zeros((1, 128), f32).at[0, jp2 * 20 + o2].set(b2[o2])

    # fc1: (512, 128), output padded to 128 lanes (cols 50.. are exactly 0).
    # w3[ip*128 + jp2*20 + o2, u] = fc1_w[u, o2*16 + ip*4 + jp2]
    ip, c, wj, u = (a.ravel() for a in np.indices((4, 20, 4, 50)))
    w3 = jnp.zeros((512, 128), f32).at[ip * 128 + wj * 20 + c, u].set(
        fw1[u, c * 16 + ip * 4 + wj])
    b3 = jnp.zeros((1, 128), f32).at[0, :50].set(fb1)

    # fc2: (128, 128); pad rows/cols are exactly 0 (softmax-mask invariant),
    # pad-lane bias = -1e30 so pad logits vanish under exp().
    w4 = jnp.zeros((128, 128), f32).at[:50, :10].set(fw2.T)
    b4 = jnp.full((1, 128), -1e30, f32).at[0, :10].set(fb2)

    return band1, bias1, band2, bias2, w3, b3, w4, b4


def _forward(params, x_nchw):
    N = x_nchw.shape[0]
    # Batch tile: multiple of 16 sublanes (bf16 packing), capped at 64 so the
    # parallel grid has >= 2 steps for N >= 128 (v7x dual-TC).
    B = min(64, _round_up(N, 16))
    N_pad = _round_up(N, B)

    # Layout plumbing: NCHW -> H-im2col (24_outH, N_pad, 5*28) in bf16, so the
    # whole conv1 tap stack is one dense K=140 MXU contraction in the kernel.
    x = jnp.pad(x_nchw[:, 0].astype(jnp.float32), ((0, N_pad - N), (0, 0), (0, 0)))
    xc = jnp.stack([x[:, di:di + 24, :] for di in range(5)], axis=2)   # (N,24,5,28)
    xc = jnp.transpose(xc, (1, 0, 2, 3)).reshape(24, N_pad, 140).astype(jnp.bfloat16)

    band1, bias1, band2, bias2, w3, b3, w4, b4 = _pack_weights(params)

    grid_spec = pltpu.PrefetchScalarGridSpec(
        num_scalar_prefetch=0,
        grid=(N_pad // B,),
        in_specs=[
            pl.BlockSpec((24, B, 140), lambda t: (0, t, 0)),      # x im2col tile
            pl.BlockSpec((140, 256), lambda t: (0, 0)),           # conv1 band (bf16)
            pl.BlockSpec((1, 128), lambda t: (0, 0)),             # conv1 bias
            pl.BlockSpec((640, 256), lambda t: (0, 0)),           # conv2 band (bf16)
            pl.BlockSpec((1, 128), lambda t: (0, 0)),             # conv2 bias
            pl.BlockSpec((512, 128), lambda t: (0, 0)),           # fc1 weight
            pl.BlockSpec((1, 128), lambda t: (0, 0)),             # fc1 bias
            pl.BlockSpec((128, 128), lambda t: (0, 0)),           # fc2 weight
            pl.BlockSpec((1, 128), lambda t: (0, 0)),             # fc2 bias(+mask)
        ],
        out_specs=pl.BlockSpec((B, 128), lambda t: (t, 0)),
    )

    out = pl.pallas_call(
        _net_kernel,
        out_shape=jax.ShapeDtypeStruct((N_pad, 128), jnp.float32),
        grid_spec=grid_spec,
        compiler_params=pltpu.CompilerParams(
            dimension_semantics=("parallel",),          # batch tiles independent
            vmem_limit_bytes=32 * 1024 * 1024),         # v5e default is 16 MiB
    )(xc, band1, bias1, band2, bias2, w3, b3, w4, b4)

    return out[:N, :10]


net_forward = jax.jit(_forward)


def init_params(key):
    """Deterministic synthetic parameters with PyTorch-default-like scaling."""
    ks = jax.random.split(key, 8)

    def uni(k, shape, fan_in):
        bound = 1.0 / np.sqrt(fan_in)
        return jax.random.uniform(k, shape, jnp.float32, -bound, bound)

    return {
        'conv1_w': uni(ks[0], (10, 1, 5, 5), 1 * 5 * 5),
        'conv1_b': uni(ks[1], (10,), 1 * 5 * 5),
        'conv2_w': uni(ks[2], (20, 10, 5, 5), 10 * 5 * 5),
        'conv2_b': uni(ks[3], (20,), 10 * 5 * 5),
        'fc1_w': uni(ks[4], (50, 320), 320),
        'fc1_b': uni(ks[5], (50,), 320),
        'fc2_w': uni(ks[6], (10, 50), 50),
        'fc2_b': uni(ks[7], (10,), 50),
    }


def reference_forward(params, x_nchw):
    """Pure-JAX f32 reference reproducing the PyTorch eval-mode forward."""
    x = jnp.transpose(x_nchw, (0, 2, 3, 1)).astype(jnp.float32)       # NHWC
    dn = ('NHWC', 'HWIO', 'NHWC')
    y = lax.conv_general_dilated(x, jnp.transpose(params['conv1_w'], (2, 3, 1, 0)),
                                 (1, 1), 'VALID', dimension_numbers=dn)
    y = y + params['conv1_b']
    y = lax.reduce_window(y, -jnp.inf, lax.max, (1, 2, 2, 1), (1, 2, 2, 1), 'VALID')
    y = jnp.maximum(y, 0.0)
    y = lax.conv_general_dilated(y, jnp.transpose(params['conv2_w'], (2, 3, 1, 0)),
                                 (1, 1), 'VALID', dimension_numbers=dn)
    y = y + params['conv2_b']
    y = lax.reduce_window(y, -jnp.inf, lax.max, (1, 2, 2, 1), (1, 2, 2, 1), 'VALID')
    y = jnp.maximum(y, 0.0)
    y = jnp.transpose(y, (0, 3, 1, 2)).reshape(x.shape[0], 320)        # NCHW flatten
    y = jnp.maximum(y @ params['fc1_w'].T + params['fc1_b'], 0.0)
    y = y @ params['fc2_w'].T + params['fc2_b']
    return jax.nn.softmax(y, axis=1)


if __name__ == "__main__":
    key = jax.random.PRNGKey(0)
    pkey, xkey = jax.random.split(key)
    params = init_params(pkey)
    # Input implied by the module: MNIST-style NCHW, 1x28x28 (320 = 20*4*4).
    x = jax.random.normal(xkey, (2, 1, 28, 28), jnp.float32)

    out = jax.block_until_ready(net_forward(params, x))
    ref = jax.block_until_ready(reference_forward(params, x))

    assert out.shape == (2, 10)
    # Tolerance reflects bf16 conv-path operands in the kernel vs. the f32
    # reference (fc path is kept in f32); softmax outputs are O(0.1).
    np.testing.assert_allclose(np.asarray(out), np.asarray(ref), rtol=1e-2, atol=1e-3)
    print("KERNEL_OK")
</pallas_src>

<mosaic_0001>
module attributes {stable_mosaic.version = 11 : i64} {
  func.func private @main(%arg0: i32) attributes {dimension_semantics = [#tpu.dimension_semantics<core_parallel>], iteration_bounds = array<i64: 2>, tpu.core_type = #tpu.core_type<sc_scalar_subcore>, window_params = []} {
    return
  }
}

module attributes {stable_mosaic.version = 11 : i64} {
  func.func private @main(%arg0: i32) attributes {dimension_semantics = [#tpu.dimension_semantics<core_parallel>], iteration_bounds = array<i64: 2>, tpu.core_type = #tpu.core_type<sc_scalar_subcore>, window_params = []} {
    return
  }
}

module attributes {stable_mosaic.version = 11 : i64} {
  func.func @_net_kernel(%arg0: i32, %arg1: memref<24x16x140xbf16, #tpu.memory_space<vmem>>, %arg2: memref<140x256xbf16, #tpu.memory_space<vmem>>, %arg3: memref<1x128xf32, #tpu.memory_space<vmem>>, %arg4: memref<640x256xbf16, #tpu.memory_space<vmem>>, %arg5: memref<1x128xf32, #tpu.memory_space<vmem>>, %arg6: memref<512x128xf32, #tpu.memory_space<vmem>>, %arg7: memref<1x128xf32, #tpu.memory_space<vmem>>, %arg8: memref<128x128xf32, #tpu.memory_space<vmem>>, %arg9: memref<1x128xf32, #tpu.memory_space<vmem>>, %arg10: memref<16x128xf32, #tpu.memory_space<vmem>>) attributes {dimension_semantics = [#tpu.dimension_semantics<parallel>], iteration_bounds = array<i64: 1>, scalar_prefetch = 0 : i64, scratch_operands = 0 : i64, tpu.core_type = #tpu.core_type<tc>, window_params = [{transform_indices = @transform_0, window_bounds = array<i64: 24, 16, 140>}, {pipeline_mode = #tpu.pipeline_mode<synchronous>, transform_indices = @transform_1, window_bounds = array<i64: 140, 256>}, {pipeline_mode = #tpu.pipeline_mode<synchronous>, transform_indices = @transform_2, window_bounds = array<i64: 1, 128>}, {pipeline_mode = #tpu.pipeline_mode<synchronous>, transform_indices = @transform_3, window_bounds = array<i64: 640, 256>}, {pipeline_mode = #tpu.pipeline_mode<synchronous>, transform_indices = @transform_4, window_bounds = array<i64: 1, 128>}, {pipeline_mode = #tpu.pipeline_mode<synchronous>, transform_indices = @transform_5, window_bounds = array<i64: 512, 128>}, {pipeline_mode = #tpu.pipeline_mode<synchronous>, transform_indices = @transform_6, window_bounds = array<i64: 1, 128>}, {pipeline_mode = #tpu.pipeline_mode<synchronous>, transform_indices = @transform_7, window_bounds = array<i64: 128, 128>}, {pipeline_mode = #tpu.pipeline_mode<synchronous>, transform_indices = @transform_8, window_bounds = array<i64: 1, 128>}, {transform_indices = @transform_9, window_bounds = array<i64: 16, 128>}]} {
    %c0 = arith.constant 0 : index
    %c0_0 = arith.constant 0 : index
    %c0_1 = arith.constant 0 : index
    %0 = vector.load %arg1[%c0, %c0_0, %c0_1] : memref<24x16x140xbf16, #tpu.memory_space<vmem>>, vector<24x16x140xbf16>
    %1 = vector.shape_cast %0 : vector<24x16x140xbf16> to vector<384x140xbf16>
    %c0_2 = arith.constant 0 : index
    %c0_3 = arith.constant 0 : index
    %2 = vector.load %arg2[%c0_2, %c0_3] : memref<140x256xbf16, #tpu.memory_space<vmem>>, vector<140x256xbf16>
    %cst = arith.constant dense<0.000000e+00> : vector<384x256xf32>
    %3 = tpu.matmul %1, %2, %cst {dimension_numbers = #tpu.dot_dimension_numbers<[1], [0], [0], [1], [0, 0, 1, 1], [], []>} : vector<384x140xbf16>, vector<140x256xbf16>, vector<384x256xf32> -> vector<384x256xf32>
    %4 = vector.extract_strided_slice %3 {offsets = [0, 0], sizes = [384, 128], strides = [1, 1]} : vector<384x256xf32> to vector<384x128xf32>
    %5 = vector.extract_strided_slice %3 {offsets = [0, 128], sizes = [384, 128], strides = [1, 1]} : vector<384x256xf32> to vector<384x128xf32>
    %6 = arith.maximumf %4, %5 : vector<384x128xf32>
    %7 = vector.shape_cast %6 : vector<384x128xf32> to vector<12x2x16x128xf32>
    %8 = vector.extract_strided_slice %7 {offsets = [0, 0, 0, 0], sizes = [12, 1, 16, 128], strides = [1, 1, 1, 1]} : vector<12x2x16x128xf32> to vector<12x1x16x128xf32>
    %9 = vector.shape_cast %8 : vector<12x1x16x128xf32> to vector<12x16x128xf32>
    %10 = vector.extract_strided_slice %7 {offsets = [0, 1, 0, 0], sizes = [12, 1, 16, 128], strides = [1, 1, 1, 1]} : vector<12x2x16x128xf32> to vector<12x1x16x128xf32>
    %11 = vector.shape_cast %10 : vector<12x1x16x128xf32> to vector<12x16x128xf32>
    %12 = arith.maximumf %9, %11 : vector<12x16x128xf32>
    %c0_4 = arith.constant 0 : index
    %c0_5 = arith.constant 0 : index
    %13 = vector.load %arg3[%c0_4, %c0_5] : memref<1x128xf32, #tpu.memory_space<vmem>>, vector<1x128xf32>
    %14 = vector.shape_cast %13 : vector<1x128xf32> to vector<1x1x128xf32>
    %15 = vector.broadcast %14 : vector<1x1x128xf32> to vector<12x16x128xf32>
    %16 = arith.addf %12, %15 : vector<12x16x128xf32>
    %cst_6 = arith.constant 0.000000e+00 : f32
    %17 = vector.broadcast %cst_6 : f32 to vector<12x16x128xf32>
    %18 = arith.maximumf %16, %17 : vector<12x16x128xf32>
    %19 = arith.truncf %18 : vector<12x16x128xf32> to vector<12x16x128xbf16>
    %20 = vector.extract_strided_slice %19 {offsets = [0, 0, 0], sizes = [8, 16, 128], strides = [1, 1, 1]} : vector<12x16x128xbf16> to vector<8x16x128xbf16>
    %21 = vector.extract_strided_slice %19 {offsets = [1, 0, 0], sizes = [8, 16, 128], strides = [1, 1, 1]} : vector<12x16x128xbf16> to vector<8x16x128xbf16>
    %22 = vector.extract_strided_slice %19 {offsets = [2, 0, 0], sizes = [8, 16, 128], strides = [1, 1, 1]} : vector<12x16x128xbf16> to vector<8x16x128xbf16>
    %23 = vector.extract_strided_slice %19 {offsets = [3, 0, 0], sizes = [8, 16, 128], strides = [1, 1, 1]} : vector<12x16x128xbf16> to vector<8x16x128xbf16>
    %24 = vector.extract_strided_slice %19 {offsets = [4, 0, 0], sizes = [8, 16, 128], strides = [1, 1, 1]} : vector<12x16x128xbf16> to vector<8x16x128xbf16>
    %25 = tpu.concatenate %20, %21, %22, %23, %24 in 2 : vector<8x16x128xbf16>, vector<8x16x128xbf16>, vector<8x16x128xbf16>, vector<8x16x128xbf16>, vector<8x16x128xbf16> -> vector<8x16x640xbf16>
    %26 = vector.shape_cast %25 : vector<8x16x640xbf16> to vector<128x640xbf16>
    %c0_7 = arith.constant 0 : index
    %c0_8 = arith.constant 0 : index
    %27 = vector.load %arg4[%c0_7, %c0_8] : memref<640x256xbf16, #tpu.memory_space<vmem>>, vector<640x256xbf16>
    %cst_9 = arith.constant dense<0.000000e+00> : vector<128x256xf32>
    %28 = tpu.matmul %26, %27, %cst_9 {dimension_numbers = #tpu.dot_dimension_numbers<[1], [0], [0], [1], [0, 0, 1, 1], [], []>} : vector<128x640xbf16>, vector<640x256xbf16>, vector<128x256xf32> -> vector<128x256xf32>
    %29 = vector.extract_strided_slice %28 {offsets = [0, 0], sizes = [128, 128], strides = [1, 1]} : vector<128x256xf32> to vector<128x128xf32>
    %30 = vector.extract_strided_slice %28 {offsets = [0, 128], sizes = [128, 128], strides = [1, 1]} : vector<128x256xf32> to vector<128x128xf32>
    %31 = arith.maximumf %29, %30 : vector<128x128xf32>
    %32 = vector.shape_cast %31 : vector<128x128xf32> to vector<4x2x16x128xf32>
    %33 = vector.extract_strided_slice %32 {offsets = [0, 0, 0, 0], sizes = [4, 1, 16, 128], strides = [1, 1, 1, 1]} : vector<4x2x16x128xf32> to vector<4x1x16x128xf32>
    %34 = vector.shape_cast %33 : vector<4x1x16x128xf32> to vector<4x16x128xf32>
    %35 = vector.extract_strided_slice %32 {offsets = [0, 1, 0, 0], sizes = [4, 1, 16, 128], strides = [1, 1, 1, 1]} : vector<4x2x16x128xf32> to vector<4x1x16x128xf32>
    %36 = vector.shape_cast %35 : vector<4x1x16x128xf32> to vector<4x16x128xf32>
    %37 = arith.maximumf %34, %36 : vector<4x16x128xf32>
    %c0_10 = arith.constant 0 : index
    %c0_11 = arith.constant 0 : index
    %38 = vector.load %arg5[%c0_10, %c0_11] : memref<1x128xf32, #tpu.memory_space<vmem>>, vector<1x128xf32>
    %39 = vector.shape_cast %38 : vector<1x128xf32> to vector<1x1x128xf32>
    %40 = vector.broadcast %39 : vector<1x1x128xf32> to vector<4x16x128xf32>
    %41 = arith.addf %37, %40 : vector<4x16x128xf32>
    %cst_12 = arith.constant 0.000000e+00 : f32
    %42 = vector.broadcast %cst_12 : f32 to vector<4x16x128xf32>
    %43 = arith.maximumf %41, %42 : vector<4x16x128xf32>
    %44 = vector.extract_strided_slice %43 {offsets = [0, 0, 0], sizes = [1, 16, 128], strides = [1, 1, 1]} : vector<4x16x128xf32> to vector<1x16x128xf32>
    %45 = vector.shape_cast %44 : vector<1x16x128xf32> to vector<16x128xf32>
    %46 = vector.extract_strided_slice %43 {offsets = [1, 0, 0], sizes = [1, 16, 128], strides = [1, 1, 1]} : vector<4x16x128xf32> to vector<1x16x128xf32>
    %47 = vector.shape_cast %46 : vector<1x16x128xf32> to vector<16x128xf32>
    %48 = vector.extract_strided_slice %43 {offsets = [2, 0, 0], sizes = [1, 16, 128], strides = [1, 1, 1]} : vector<4x16x128xf32> to vector<1x16x128xf32>
    %49 = vector.shape_cast %48 : vector<1x16x128xf32> to vector<16x128xf32>
    %50 = vector.extract_strided_slice %43 {offsets = [3, 0, 0], sizes = [1, 16, 128], strides = [1, 1, 1]} : vector<4x16x128xf32> to vector<1x16x128xf32>
    %51 = vector.shape_cast %50 : vector<1x16x128xf32> to vector<16x128xf32>
    %52 = tpu.concatenate %45, %47, %49, %51 in 1 : vector<16x128xf32>, vector<16x128xf32>, vector<16x128xf32>, vector<16x128xf32> -> vector<16x512xf32>
    %c0_13 = arith.constant 0 : index
    %c0_14 = arith.constant 0 : index
    %53 = vector.load %arg6[%c0_13, %c0_14] : memref<512x128xf32, #tpu.memory_space<vmem>>, vector<512x128xf32>
    %cst_15 = arith.constant dense<0.000000e+00> : vector<16x128xf32>
    %54 = tpu.matmul %52, %53, %cst_15 {dimension_numbers = #tpu.dot_dimension_numbers<[1], [0], [0], [1], [0, 0, 1, 1], [], []>} : vector<16x512xf32>, vector<512x128xf32>, vector<16x128xf32> -> vector<16x128xf32>
    %c0_16 = arith.constant 0 : index
    %c0_17 = arith.constant 0 : index
    %55 = vector.load %arg7[%c0_16, %c0_17] : memref<1x128xf32, #tpu.memory_space<vmem>>, vector<1x128xf32>
    %56 = vector.broadcast %55 : vector<1x128xf32> to vector<16x128xf32>
    %57 = arith.addf %54, %56 : vector<16x128xf32>
    %cst_18 = arith.constant 0.000000e+00 : f32
    %58 = vector.broadcast %cst_18 : f32 to vector<16x128xf32>
    %59 = arith.maximumf %57, %58 : vector<16x128xf32>
    %c0_19 = arith.constant 0 : index
    %c0_20 = arith.constant 0 : index
    %60 = vector.load %arg8[%c0_19, %c0_20] : memref<128x128xf32, #tpu.memory_space<vmem>>, vector<128x128xf32>
    %cst_21 = arith.constant dense<0.000000e+00> : vector<16x128xf32>
    %61 = tpu.matmul %59, %60, %cst_21 {dimension_numbers = #tpu.dot_dimension_numbers<[1], [0], [0], [1], [0, 0, 1, 1], [], []>} : vector<16x128xf32>, vector<128x128xf32>, vector<16x128xf32> -> vector<16x128xf32>
    %c0_22 = arith.constant 0 : index
    %c0_23 = arith.constant 0 : index
    %62 = vector.load %arg9[%c0_22, %c0_23] : memref<1x128xf32, #tpu.memory_space<vmem>>, vector<1x128xf32>
    %63 = vector.broadcast %62 : vector<1x128xf32> to vector<16x128xf32>
    %64 = arith.addf %61, %63 : vector<16x128xf32>
    %cst_24 = arith.constant dense<0xFF800000> : vector<16xf32>
    %65 = vector.multi_reduction <maximumf>, %64, %cst_24 [1] : vector<16x128xf32> to vector<16xf32>
    %66 = vector.shape_cast %65 : vector<16xf32> to vector<16x1xf32>
    %67 = vector.broadcast %66 : vector<16x1xf32> to vector<16x128xf32>
    %68 = arith.subf %64, %67 : vector<16x128xf32>
    %69 = math.exp %68 : vector<16x128xf32>
    %cst_25 = arith.constant dense<0.000000e+00> : vector<16xf32>
    %70 = vector.multi_reduction <add>, %69, %cst_25 [1] : vector<16x128xf32> to vector<16xf32>
    %71 = vector.shape_cast %70 : vector<16xf32> to vector<16x1xf32>
    %72 = tpu.reciprocal %71 : vector<16x1xf32> -> vector<16x1xf32>
    %73 = vector.broadcast %72 : vector<16x1xf32> to vector<16x128xf32>
    %74 = arith.mulf %69, %73 : vector<16x128xf32>
    %c0_26 = arith.constant 0 : index
    %c0_27 = arith.constant 0 : index
    %75 = vector.load %arg10[%c0_26, %c0_27] : memref<16x128xf32, #tpu.memory_space<vmem>>, vector<16x128xf32>
    tpu.vector_store %arg10[%c0_26, %c0_27], %74 {strides = array<i32>} : memref<16x128xf32, #tpu.memory_space<vmem>>, vector<16x128xf32>,
    return
  }
  func.func @transform_0(%arg0: i32) -> (i32, i32, i32) {
    %c0_i32 = arith.constant 0 : i32
    %c0_i32_0 = arith.constant 0 : i32
    %c0_i32_1 = arith.constant 0 : i32
    return %c0_i32, %arg0, %c0_i32_0 : i32, i32, i32
  }
  func.func @transform_1(%arg0: i32) -> (i32, i32) {
    %c0_i32 = arith.constant 0 : i32
    %c0_i32_0 = arith.constant 0 : i32
    %c0_i32_1 = arith.constant 0 : i32
    return %c0_i32, %c0_i32_0 : i32, i32
  }
  func.func @transform_2(%arg0: i32) -> (i32, i32) {
    %c0_i32 = arith.constant 0 : i32
    %c0_i32_0 = arith.constant 0 : i32
    %c0_i32_1 = arith.constant 0 : i32
    return %c0_i32, %c0_i32_0 : i32, i32
  }
  func.func @transform_3(%arg0: i32) -> (i32, i32) {
    %c0_i32 = arith.constant 0 : i32
    %c0_i32_0 = arith.constant 0 : i32
    %c0_i32_1 = arith.constant 0 : i32
    return %c0_i32, %c0_i32_0 : i32, i32
  }
  func.func @transform_4(%arg0: i32) -> (i32, i32) {
    %c0_i32 = arith.constant 0 : i32
    %c0_i32_0 = arith.constant 0 : i32
    %c0_i32_1 = arith.constant 0 : i32
    return %c0_i32, %c0_i32_0 : i32, i32
  }
  func.func @transform_5(%arg0: i32) -> (i32, i32) {
    %c0_i32 = arith.constant 0 : i32
    %c0_i32_0 = arith.constant 0 : i32
    %c0_i32_1 = arith.constant 0 : i32
    return %c0_i32, %c0_i32_0 : i32, i32
  }
  func.func @transform_6(%arg0: i32) -> (i32, i32) {
    %c0_i32 = arith.constant 0 : i32
    %c0_i32_0 = arith.constant 0 : i32
    %c0_i32_1 = arith.constant 0 : i32
    return %c0_i32, %c0_i32_0 : i32, i32
  }
  func.func @transform_7(%arg0: i32) -> (i32, i32) {
    %c0_i32 = arith.constant 0 : i32
    %c0_i32_0 = arith.constant 0 : i32
    %c0_i32_1 = arith.constant 0 : i32
    return %c0_i32, %c0_i32_0 : i32, i32
  }
  func.func @transform_8(%arg0: i32) -> (i32, i32) {
    %c0_i32 = arith.constant 0 : i32
    %c0_i32_0 = arith.constant 0 : i32
    %c0_i32_1 = arith.constant 0 : i32
    return %c0_i32, %c0_i32_0 : i32, i32
  }
  func.func @transform_9(%arg0: i32) -> (i32, i32) {
    %c0_i32 = arith.constant 0 : i32
    %c0_i32_0 = arith.constant 0 : i32
    return %arg0, %c0_i32 : i32, i32
  }
}

</mosaic_0001>

<llo_original>
// kernel: _forward.1
$region0: #{_forward.1}
  #allocation0 [shape = 'u32[]', space=smem, size = 0x4, offset = 0x4, fixed_abs, tag = 'smem constant byte address 0x4 - core index']
  #allocation1 [shape = 'u32[144,128]{1,0:T(1,128)}', space=vmem, size = 0x12000, scoped, tag = 'internal scratch']
  %s0 = inlined_call_operand.vmem [shape: bf16[24,16,140], index: 0, kind: input, shape index: {}]
  %s1 = inlined_call_operand.vmem [shape: bf16[140,256], index: 1, kind: input, shape index: {}]
  %s2 = inlined_call_operand.vmem [shape: f32[1,128], index: 2, kind: input, shape index: {}]
  %s3 = inlined_call_operand.vmem [shape: bf16[640,256], index: 3, kind: input, shape index: {}]
  %s4 = inlined_call_operand.vmem [shape: f32[1,128], index: 4, kind: input, shape index: {}]
  %s5 = inlined_call_operand.vmem [shape: f32[512,128], index: 5, kind: input, shape index: {}]
  %s6 = inlined_call_operand.vmem [shape: f32[1,128], index: 6, kind: input, shape index: {}]
  %s7 = inlined_call_operand.vmem [shape: f32[128,128], index: 7, kind: input, shape index: {}]
  %s8 = inlined_call_operand.vmem [shape: f32[1,128], index: 8, kind: input, shape index: {}]
  %s9 = inlined_call_operand.vmem [shape: f32[16,128], index: 9, kind: output, shape index: {}]
  %s10 = sld [smem:[#allocation0]]
  $region46: #{_forward.1} parent=0
    _
  %s12 = ssub.s32 1, %s10
  %s13 = scalar_select 0, %s12, %s10
  // Predicated region
  $region2: #{_forward.1} parent=0 // pred_check
    _
  $region3: #{_forward.1} parent=0 // pred_check_branch
    %15 = sbr.rel (0) target = $region5
  $region4: #{_forward.1} parent=0 // pred_region
    _
  $region5: #{_forward.1} parent=0 // pred_fallthru
    _
  // Predicated region
  $region6: #{_forward.1} parent=0 // pred_check
    _
  $region7: #{_forward.1} parent=0 // pred_check_branch
    %17 = sbr.rel (0) target = $region9
  $region8: #{_forward.1} parent=0 // pred_region
    _
  $region9: #{_forward.1} parent=0 // pred_fallthru
    _
  // Predicated region
  $region10: #{_forward.1} parent=0 // pred_check
    _
  $region11: #{_forward.1} parent=0 // pred_check_branch
    %19 = sbr.rel (0) target = $region13
  $region12: #{_forward.1} parent=0 // pred_region
    _
  $region13: #{_forward.1} parent=0 // pred_fallthru
    _
  // Predicated region
  $region14: #{_forward.1} parent=0 // pred_check
    _
  $region15: #{_forward.1} parent=0 // pred_check_branch
    %21 = sbr.rel (0) target = $region17
  $region16: #{_forward.1} parent=0 // pred_region
    _
  $region17: #{_forward.1} parent=0 // pred_fallthru
    _
  // Predicated region
  $region18: #{_forward.1} parent=0 // pred_check
    _
  $region19: #{_forward.1} parent=0 // pred_check_branch
    %23 = sbr.rel (0) target = $region21
  $region20: #{_forward.1} parent=0 // pred_region
    _
  $region21: #{_forward.1} parent=0 // pred_fallthru
    _
  // Predicated region
  $region22: #{_forward.1} parent=0 // pred_check
    _
  $region23: #{_forward.1} parent=0 // pred_check_branch
    %25 = sbr.rel (0) target = $region25
  $region24: #{_forward.1} parent=0 // pred_region
    _
  $region25: #{_forward.1} parent=0 // pred_fallthru
    _
  // Predicated region
  $region26: #{_forward.1} parent=0 // pred_check
    _
  $region27: #{_forward.1} parent=0 // pred_check_branch
    %27 = sbr.rel (0) target = $region29
  $region28: #{_forward.1} parent=0 // pred_region
    _
  $region29: #{_forward.1} parent=0 // pred_fallthru
    _
  // Predicated region
  $region30: #{_forward.1} parent=0 // pred_check
    _
  $region31: #{_forward.1} parent=0 // pred_check_branch
    %29 = sbr.rel (0) target = $region33
  $region32: #{_forward.1} parent=0 // pred_region
    _
  $region33: #{_forward.1} parent=0 // pred_fallthru
    _
  // Predicated region
  $region34: #{_forward.1} parent=0 // pred_check
    _
  $region35: #{_forward.1} parent=0 // pred_check_branch
    %31 = sbr.rel (0) target = $region37
  $region36: #{_forward.1} parent=0 // pred_region
    _
  $region37: #{_forward.1} parent=0 // pred_fallthru
    _
  %v33 = vld [vmem:[%s0] sm:$0xff]
  %v34 = vld [vmem:[%s0 + $0x8] sm:$0xff]
  %v35 = vld [vmem:[%s0 + $0x10] sm:$0xff]
  %v36 = vld [vmem:[%s0 + $0x18] sm:$0xff]
  %v37 = vld [vmem:[%s0 + $0x20] sm:$0xff]
  %v38 = vld [vmem:[%s0 + $0x28] sm:$0xff]
  %v39 = vld [vmem:[%s0 + $0x30] sm:$0xff]
  %v40 = vld [vmem:[%s0 + $0x38] sm:$0xff]
  %v41 = vld [vmem:[%s0 + $0x40] sm:$0xff]
  %v42 = vld [vmem:[%s0 + $0x48] sm:$0xff]
  %v43 = vld [vmem:[%s0 + $0x50] sm:$0xff]
  %v44 = vld [vmem:[%s0 + $0x58] sm:$0xff]
  %v45 = vld [vmem:[%s0 + $0x60] sm:$0xff]
  %v46 = vld [vmem:[%s0 + $0x68] sm:$0xff]
  %v47 = vld [vmem:[%s0 + $0x70] sm:$0xff]
  %v48 = vld [vmem:[%s0 + $0x78] sm:$0xff]
  %v49 = vld [vmem:[%s0 + $0x80] sm:$0xff]
  %v50 = vld [vmem:[%s0 + $0x88] sm:$0xff]
  %v51 = vld [vmem:[%s0 + $0x90] sm:$0xff]
  %v52 = vld [vmem:[%s0 + $0x98] sm:$0xff]
  %v53 = vld [vmem:[%s0 + $0xa0] sm:$0xff]
  %v54 = vld [vmem:[%s0 + $0xa8] sm:$0xff]
  %v55 = vld [vmem:[%s0 + $0xb0] sm:$0xff]
  %v56 = vld [vmem:[%s0 + $0xb8] sm:$0xff]
  %v57 = vld [vmem:[%s0 + $0xc0] sm:$0xff]
  %v58 = vld [vmem:[%s0 + $0xc8] sm:$0xff]
  %v59 = vld [vmem:[%s0 + $0xd0] sm:$0xff]
  %v60 = vld [vmem:[%s0 + $0xd8] sm:$0xff]
  %v61 = vld [vmem:[%s0 + $0xe0] sm:$0xff]
  %v62 = vld [vmem:[%s0 + $0xe8] sm:$0xff]
  %v63 = vld [vmem:[%s0 + $0xf0] sm:$0xff]
  %v64 = vld [vmem:[%s0 + $0xf8] sm:$0xff]
  %v65 = vld [vmem:[%s0 + $0x100] sm:$0xff]
  %v66 = vld [vmem:[%s0 + $0x108] sm:$0xff]
  %v67 = vld [vmem:[%s0 + $0x110] sm:$0xff]
  %v68 = vld [vmem:[%s0 + $0x118] sm:$0xff]
  %v69 = vld [vmem:[%s0 + $0x120] sm:$0xff]
  %v70 = vld [vmem:[%s0 + $0x128] sm:$0xff]
  %v71 = vld [vmem:[%s0 + $0x130] sm:$0xff]
  %v72 = vld [vmem:[%s0 + $0x138] sm:$0xff]
  %v73 = vld [vmem:[%s0 + $0x140] sm:$0xff]
  %v74 = vld [vmem:[%s0 + $0x148] sm:$0xff]
  %v75 = vld [vmem:[%s0 + $0x150] sm:$0xff]
  %v76 = vld [vmem:[%s0 + $0x158] sm:$0xff]
  %v77 = vld [vmem:[%s0 + $0x160] sm:$0xff]
  %v78 = vld [vmem:[%s0 + $0x168] sm:$0xff]
  %v79 = vld [vmem:[%s0 + $0x170] sm:$0xff]
  %v80 = vld [vmem:[%s0 + $0x178] sm:$0xff]
  %v81 = vld [vmem:[%s1] sm:$0xff]
  %v82 = vld [vmem:[%s1 + $0x8] sm:$0xff]
  %v83 = vld [vmem:[%s1 + $0x10] sm:$0xff]
  %v84 = vld [vmem:[%s1 + $0x18] sm:$0xff]
  %v85 = vld [vmem:[%s1 + $0x20] sm:$0xff]
  %v86 = vld [vmem:[%s1 + $0x28] sm:$0xff]
  %v87 = vld [vmem:[%s1 + $0x30] sm:$0xff]
  %v88 = vld [vmem:[%s1 + $0x38] sm:$0xff]
  %v89 = vld [vmem:[%s1 + $0x40] sm:$0xff]
  %v90 = vld [vmem:[%s1 + $0x48] sm:$0xff]
  %v91 = vld [vmem:[%s1 + $0x50] sm:$0xff]
  %v92 = vld [vmem:[%s1 + $0x58] sm:$0xff]
  %v93 = vld [vmem:[%s1 + $0x60] sm:$0xff]
  %v94 = vld [vmem:[%s1 + $0x68] sm:$0xff]
  %v95 = vld [vmem:[%s1 + $0x70] sm:$0xff]
  %v96 = vld [vmem:[%s1 + $0x78] sm:$0xff]
  %v97 = vld [vmem:[%s1 + $0x80] sm:$0xff]
  %v98 = vld [vmem:[%s1 + $0x88] sm:$0x33]
  %v147 = vunpack.c.l.b16 %v33
  %v148 = vunpack.c.h.b16 %v33
  %v149 = vunpack.c.l.b16 %v34
  %v150 = vunpack.c.h.b16 %v34
  %v151 = vunpack.c.l.b16 %v35
  %v152 = vunpack.c.h.b16 %v35
  %v153 = vunpack.c.l.b16 %v36
  %v154 = vunpack.c.h.b16 %v36
  %v155 = vunpack.c.l.b16 %v37
  %v156 = vunpack.c.h.b16 %v37
  %v157 = vunpack.c.l.b16 %v38
  %v158 = vunpack.c.h.b16 %v38
  %v159 = vunpack.c.l.b16 %v39
  %v160 = vunpack.c.h.b16 %v39
  %v161 = vunpack.c.l.b16 %v40
  %v162 = vunpack.c.h.b16 %v40
  %v163 = vunpack.c.l.b16 %v41
  %v164 = vunpack.c.h.b16 %v41
  %v165 = vunpack.c.l.b16 %v42
  %v166 = vunpack.c.h.b16 %v42
  %v167 = vunpack.c.l.b16 %v43
  %v168 = vunpack.c.h.b16 %v43
  %v169 = vunpack.c.l.b16 %v44
  %v170 = vunpack.c.h.b16 %v44
  %v171 = vunpack.c.l.b16 %v45
  %v172 = vunpack.c.h.b16 %v45
  %v173 = vunpack.c.l.b16 %v46
  %v174 = vunpack.c.h.b16 %v46
  %v175 = vunpack.c.l.b16 %v47
  %v176 = vunpack.c.h.b16 %v47
  %v177 = vunpack.c.l.b16 %v48
  %v178 = vunpack.c.h.b16 %v48
  %v179 = vunpack.c.l.b16 %v49
  %v180 = vunpack.c.h.b16 %v49
  %v181 = vunpack.c.l.b16 %v50
  %v182 = vunpack.c.h.b16 %v50
  %v183 = vunpack.c.l.b16 %v51
  %v184 = vunpack.c.h.b16 %v51
  %v185 = vunpack.c.l.b16 %v52
  %v186 = vunpack.c.h.b16 %v52
  %v187 = vunpack.c.l.b16 %v53
  %v188 = vunpack.c.h.b16 %v53
  %v189 = vunpack.c.l.b16 %v54
  %v190 = vunpack.c.h.b16 %v54
  %v191 = vunpack.c.l.b16 %v55
  %v192 = vunpack.c.h.b16 %v55
  %v193 = vunpack.c.l.b16 %v56
  %v194 = vunpack.c.h.b16 %v56
  %v195 = vunpack.c.l.b16 %v57
  %v196 = vunpack.c.h.b16 %v57
  %v197 = vunpack.c.l.b16 %v58
  %v198 = vunpack.c.h.b16 %v58
  %v199 = vunpack.c.l.b16 %v59
  %v200 = vunpack.c.h.b16 %v59
  %v201 = vunpack.c.l.b16 %v60
  %v202 = vunpack.c.h.b16 %v60
  %v203 = vunpack.c.l.b16 %v61
  %v204 = vunpack.c.h.b16 %v61
  %v205 = vunpack.c.l.b16 %v62
  %v206 = vunpack.c.h.b16 %v62
  %v207 = vunpack.c.l.b16 %v63
  %v208 = vunpack.c.h.b16 %v63
  %v209 = vunpack.c.l.b16 %v64
  %v210 = vunpack.c.h.b16 %v64
  %v211 = vunpack.c.l.b16 %v65
  %v212 = vunpack.c.h.b16 %v65
  %v213 = vunpack.c.l.b16 %v66
  %v214 = vunpack.c.h.b16 %v66
  %v215 = vunpack.c.l.b16 %v67
  %v216 = vunpack.c.h.b16 %v67
  %v217 = vunpack.c.l.b16 %v68
  %v218 = vunpack.c.h.b16 %v68
  %v219 = vunpack.c.l.b16 %v69
  %v220 = vunpack.c.h.b16 %v69
  %v221 = vunpack.c.l.b16 %v70
  %v222 = vunpack.c.h.b16 %v70
  %v223 = vunpack.c.l.b16 %v71
  %v224 = vunpack.c.h.b16 %v71
  %v225 = vunpack.c.l.b16 %v72
  %v226 = vunpack.c.h.b16 %v72
  %v227 = vunpack.c.l.b16 %v73
  %v228 = vunpack.c.h.b16 %v73
  %v229 = vunpack.c.l.b16 %v74
  %v230 = vunpack.c.h.b16 %v74
  %v231 = vunpack.c.l.b16 %v75
  %v232 = vunpack.c.h.b16 %v75
  %v233 = vunpack.c.l.b16 %v76
  %v234 = vunpack.c.h.b16 %v76
  %v235 = vunpack.c.l.b16 %v77
  %v236 = vunpack.c.h.b16 %v77
  %v237 = vunpack.c.l.b16 %v78
  %v238 = vunpack.c.h.b16 %v78
  %v239 = vunpack.c.l.b16 %v79
  %v240 = vunpack.c.h.b16 %v79
  %v241 = vunpack.c.l.b16 %v80
  %v242 = vunpack.c.h.b16 %v80
  %v243 = vpack.c.b16 %v149, %v147
  %v244 = vpack.c.b16 %v150, %v148
  %v245 = vpack.c.b16 %v153, %v151
  %v246 = vpack.c.b16 %v154, %v152
  %v247 = vpack.c.b16 %v157, %v155
  %v248 = vpack.c.b16 %v158, %v156
  %v249 = vpack.c.b16 %v161, %v159
  %v250 = vpack.c.b16 %v162, %v160
  %v251 = vpack.c.b16 %v165, %v163
  %v252 = vpack.c.b16 %v166, %v164
  %v253 = vpack.c.b16 %v169, %v167
  %v254 = vpack.c.b16 %v170, %v168
  %v255 = vpack.c.b16 %v173, %v171
  %v256 = vpack.c.b16 %v174, %v172
  %v257 = vpack.c.b16 %v177, %v175
  %v258 = vpack.c.b16 %v178, %v176
  %v259 = vpack.c.b16 %v181, %v179
  %v260 = vpack.c.b16 %v182, %v180
  %v261 = vpack.c.b16 %v185, %v183
  %v262 = vpack.c.b16 %v186, %v184
  %v263 = vpack.c.b16 %v189, %v187
  %v264 = vpack.c.b16 %v190, %v188
  %v265 = vpack.c.b16 %v193, %v191
  %v266 = vpack.c.b16 %v194, %v192
  %v267 = vpack.c.b16 %v197, %v195
  %v268 = vpack.c.b16 %v198, %v196
  %v269 = vpack.c.b16 %v201, %v199
  %v270 = vpack.c.b16 %v202, %v200
  %v271 = vpack.c.b16 %v205, %v203
  %v272 = vpack.c.b16 %v206, %v204
  %v273 = vpack.c.b16 %v209, %v207
  %v274 = vpack.c.b16 %v210, %v208
  %v275 = vpack.c.b16 %v213, %v211
  %v276 = vpack.c.b16 %v214, %v212
  %v277 = vpack.c.b16 %v217, %v215
  %v278 = vpack.c.b16 %v218, %v216
  %v279 = vpack.c.b16 %v221, %v219
  %v280 = vpack.c.b16 %v222, %v220
  %v281 = vpack.c.b16 %v225, %v223
  %v282 = vpack.c.b16 %v226, %v224
  %v283 = vpack.c.b16 %v229, %v227
  %v284 = vpack.c.b16 %v230, %v228
  %v285 = vpack.c.b16 %v233, %v231
  %v286 = vpack.c.b16 %v234, %v232
  %v287 = vpack.c.b16 %v237, %v235
  %v288 = vpack.c.b16 %v238, %v236
  %v289 = vpack.c.b16 %v241, %v239
  %v290 = vpack.c.b16 %v242, %v240
  %v333 = vunpack.c.l.b16 %v81
  %v334 = vunpack.c.h.b16 %v81
  %v335 = vunpack.c.l.b16 %v82
  %v336 = vunpack.c.h.b16 %v82
  %v337 = vunpack.c.l.b16 %v83
  %v338 = vunpack.c.h.b16 %v83
  %v339 = vunpack.c.l.b16 %v84
  %v340 = vunpack.c.h.b16 %v84
  %v341 = vunpack.c.l.b16 %v85
  %v342 = vunpack.c.h.b16 %v85
  %v343 = vunpack.c.l.b16 %v86
  %v344 = vunpack.c.h.b16 %v86
  %v345 = vunpack.c.l.b16 %v87
  %v346 = vunpack.c.h.b16 %v87
  %v347 = vunpack.c.l.b16 %v88
  %v348 = vunpack.c.h.b16 %v88
  %v349 = vunpack.c.l.b16 %v89
  %v350 = vunpack.c.h.b16 %v89
  %v351 = vunpack.c.l.b16 %v90
  %v352 = vunpack.c.h.b16 %v90
  %v353 = vunpack.c.l.b16 %v91
  %v354 = vunpack.c.h.b16 %v91
  %v355 = vunpack.c.l.b16 %v92
  %v356 = vunpack.c.h.b16 %v92
  %v357 = vunpack.c.l.b16 %v93
  %v358 = vunpack.c.h.b16 %v93
  %v359 = vunpack.c.l.b16 %v94
  %v360 = vunpack.c.h.b16 %v94
  %v361 = vunpack.c.l.b16 %v95
  %v362 = vunpack.c.h.b16 %v95
  %v363 = vunpack.c.l.b16 %v96
  %v364 = vunpack.c.h.b16 %v96
  %v365 = vunpack.c.l.b16 %v97
  %v366 = vunpack.c.h.b16 %v97
  %v367 = vunpack.c.l.b16 %v98
  %v368 = vunpack.c.h.b16 %v98
  %v369 = vpack.c.b16 %v335, %v333
  %v370 = vpack.c.b16 %v336, %v334
  %v371 = vpack.c.b16 %v339, %v337
  %v372 = vpack.c.b16 %v340, %v338
  %v373 = vpack.c.b16 %v343, %v341
  %v374 = vpack.c.b16 %v344, %v342
  %v375 = vpack.c.b16 %v347, %v345
  %v376 = vpack.c.b16 %v348, %v346
  %v377 = vpack.c.b16 %v351, %v349
  %v378 = vpack.c.b16 %v352, %v350
  %v379 = vpack.c.b16 %v355, %v353
  %v380 = vpack.c.b16 %v356, %v354
  %v381 = vpack.c.b16 %v359, %v357
  %v382 = vpack.c.b16 %v360, %v358
  %v383 = vpack.c.b16 %v363, %v361
  %v384 = vpack.c.b16 %v364, %v362
  %v385 = vpack.c.b16 %v367, %v365
  %v386 = vpack.c.b16 %v368, %v366
  %vm403 = vcmask 97280
  %v405 = vsel %vm403, %v244, 0
  %v408 = vsel %vm403, %v246, 0
  %v411 = vsel %vm403, %v248, 0
  %v414 = vsel %vm403, %v250, 0
  %v417 = vsel %vm403, %v252, 0
  %v420 = vsel %vm403, %v254, 0
  %v423 = vsel %vm403, %v256, 0
  %v426 = vsel %vm403, %v258, 0
  %v429 = vsel %vm403, %v260, 0
  %v432 = vsel %vm403, %v262, 0
  %v435 = vsel %vm403, %v264, 0
  %v438 = vsel %vm403, %v266, 0
  %v441 = vsel %vm403, %v268, 0
  %v444 = vsel %vm403, %v270, 0
  %v447 = vsel %vm403, %v272, 0
  %v450 = vsel %vm403, %v274, 0
  %v453 = vsel %vm403, %v276, 0
  %v456 = vsel %vm403, %v278, 0
  %v459 = vsel %vm403, %v280, 0
  %v462 = vsel %vm403, %v282, 0
  %v465 = vsel %vm403, %v284, 0
  %v468 = vsel %vm403, %v286, 0
  %v471 = vsel %vm403, %v288, 0
  %v474 = vsel %vm403, %v290, 0
  %vm476 = vcmask 1045504
  %v478 = vsel %vm476, %v385, 0
  %v481 = vsel %vm476, %v386, 0
  %483 = vmatprep.subr.bf16.mxu0 %v370
  %484 = vmatpush1.bf16.msra.mxu0 %v369
  %485 = vmatprep.subr.bf16.mxu0 %v372
  %486 = vmatpush1.bf16.msra.mxu0 %v371
  %487 = vmatprep.subr.bf16.mxu0 %v374
  %488 = vmatpush1.bf16.msra.mxu0 %v373
  %489 = vmatprep.subr.bf16.mxu0 %v376
  %490 = vmatpush1.bf16.msra.mxu0 %v375
  %491 = vmatprep.subr.bf16.mxu0 %v378
  %492 = vmatpush1.bf16.msra.mxu0 %v377
  %493 = vmatprep.subr.bf16.mxu0 %v380
  %494 = vmatpush1.bf16.msra.mxu0 %v379
  %495 = vmatprep.subr.bf16.mxu0 %v382
  %496 = vmatpush1.bf16.msra.mxu0 %v381
  %497 = vmatprep.subr.bf16.mxu0 %v384
  %498 = vmatpush1.bf16.msra.mxu0 %v383
  %499 = vmatprep.subr.bf16.mxu0 %v481
  %500 = vmatpush1.bf16.msra.mxu0 %v478
  %501 = vmatprep.subr.bf16.mxu0 0
  %502 = vmatpush1.bf16.msra.mxu0 0
  %503 = vmatprep.subr.bf16.mxu0 0
  %504 = vmatpush1.bf16.msra.mxu0 0
  %505 = vmatprep.subr.bf16.mxu0 0
  %506 = vmatpush1.bf16.msra.mxu0 0
  %507 = vmatprep.subr.bf16.mxu0 0
  %508 = vmatpush1.bf16.msra.mxu0 0
  %509 = vmatprep.subr.bf16.mxu0 0
  %510 = vmatpush1.bf16.msra.mxu0 0
  %511 = vmatprep.subr.bf16.mxu0 0
  %512 = vmatpush1.bf16.msra.mxu0 0
  %513 = vmatprep.subr.bf16.mxu0 0
  %514 = vmatpush1.bf16.msra.mxu0 0
  %515 = vmatprep.mubr.bf16.mxu0 %v405
  %516 = vmatmul.mubr.bf16.gmra.mrb[0].mxu0 %v243
  %v517 = vpop.f32.mrb[0].mxu0
  %v518 = vadd.f32 0.0, %v517
  %v519 = vpop.f32.mrb[0].mxu0
  %v520 = vadd.f32 0.0, %v519
  %v521 = vpop.f32.mrb[0].mxu0
  %v522 = vadd.f32 0.0, %v521
  %v523 = vpop.f32.mrb[0].mxu0
  %v524 = vadd.f32 0.0, %v523
  %525 = vmatprep.mubr.bf16.mxu0 %v408
  %526 = vmatmul.mubr.bf16.gmra.mrb[0].mxu0 %v245
  %v527 = vpop.f32.mrb[0].mxu0
  %v528 = vadd.f32 0.0, %v527
  %v529 = vpop.f32.mrb[0].mxu0
  %v530 = vadd.f32 0.0, %v529
  %v531 = vpop.f32.mrb[0].mxu0
  %v532 = vadd.f32 0.0, %v531
  %v533 = vpop.f32.mrb[0].mxu0
  %v534 = vadd.f32 0.0, %v533
  %535 = vmatprep.mubr.bf16.mxu0 %v411
  %536 = vmatmul.mubr.bf16.gmra.mrb[0].mxu0 %v247
  %v537 = vpop.f32.mrb[0].mxu0
  %v538 = vadd.f32 0.0, %v537
  %v539 = vpop.f32.mrb[0].mxu0
  %v540 = vadd.f32 0.0, %v539
  %v541 = vpop.f32.mrb[0].mxu0
  %v542 = vadd.f32 0.0, %v541
  %v543 = vpop.f32.mrb[0].mxu0
  %v544 = vadd.f32 0.0, %v543
  %545 = vmatprep.mubr.bf16.mxu0 %v414
  %546 = vmatmul.mubr.bf16.gmra.mrb[0].mxu0 %v249
  %v547 = vpop.f32.mrb[0].mxu0
  %v548 = vadd.f32 0.0, %v547
  %v549 = vpop.f32.mrb[0].mxu0
  %v550 = vadd.f32 0.0, %v549
  %v551 = vpop.f32.mrb[0].mxu0
  %v552 = vadd.f32 0.0, %v551
  %v553 = vpop.f32.mrb[0].mxu0
  %v554 = vadd.f32 0.0, %v553
  %555 = vmatprep.mubr.bf16.mxu0 %v417
  %556 = vmatmul.mubr.bf16.gmra.mrb[0].mxu0 %v251
  %v557 = vpop.f32.mrb[0].mxu0
  %v558 = vadd.f32 0.0, %v557
  %v559 = vpop.f32.mrb[0].mxu0
  %v560 = vadd.f32 0.0, %v559
  %v561 = vpop.f32.mrb[0].mxu0
  %v562 = vadd.f32 0.0, %v561
  %v563 = vpop.f32.mrb[0].mxu0
  %v564 = vadd.f32 0.0, %v563
  %565 = vmatprep.mubr.bf16.mxu0 %v420
  %566 = vmatmul.mubr.bf16.gmra.mrb[0].mxu0 %v253
  %v567 = vpop.f32.mrb[0].mxu0
  %v568 = vadd.f32 0.0, %v567
  %v569 = vpop.f32.mrb[0].mxu0
  %v570 = vadd.f32 0.0, %v569
  %v571 = vpop.f32.mrb[0].mxu0
  %v572 = vadd.f32 0.0, %v571
  %v573 = vpop.f32.mrb[0].mxu0
  %v574 = vadd.f32 0.0, %v573
  %575 = vmatprep.mubr.bf16.mxu0 %v423
  %576 = vmatmul.mubr.bf16.gmra.mrb[0].mxu0 %v255
  %v577 = vpop.f32.mrb[0].mxu0
  %v578 = vadd.f32 0.0, %v577
  %v579 = vpop.f32.mrb[0].mxu0
  %v580 = vadd.f32 0.0, %v579
  %v581 = vpop.f32.mrb[0].mxu0
  %v582 = vadd.f32 0.0, %v581
  %v583 = vpop.f32.mrb[0].mxu0
  %v584 = vadd.f32 0.0, %v583
  %585 = vmatprep.mubr.bf16.mxu0 %v426
  %586 = vmatmul.mubr.bf16.gmra.mrb[0].mxu0 %v257
  %v587 = vpop.f32.mrb[0].mxu0
  %v588 = vadd.f32 0.0, %v587
  %v589 = vpop.f32.mrb[0].mxu0
  %v590 = vadd.f32 0.0, %v589
  %v591 = vpop.f32.mrb[0].mxu0
  %v592 = vadd.f32 0.0, %v591
  %v593 = vpop.f32.mrb[0].mxu0
  %v594 = vadd.f32 0.0, %v593
  %595 = vmatprep.mubr.bf16.mxu0 %v429
  %596 = vmatmul.mubr.bf16.gmra.mrb[0].mxu0 %v259
  %v597 = vpop.f32.mrb[0].mxu0
  %v598 = vadd.f32 0.0, %v597
  %v599 = vpop.f32.mrb[0].mxu0
  %v600 = vadd.f32 0.0, %v599
  %v601 = vpop.f32.mrb[0].mxu0
  %v602 = vadd.f32 0.0, %v601
  %v603 = vpop.f32.mrb[0].mxu0
  %v604 = vadd.f32 0.0, %v603
  %605 = vmatprep.mubr.bf16.mxu0 %v432
  %606 = vmatmul.mubr.bf16.gmra.mrb[0].mxu0 %v261
  %v607 = vpop.f32.mrb[0].mxu0
  %v608 = vadd.f32 0.0, %v607
  %v609 = vpop.f32.mrb[0].mxu0
  %v610 = vadd.f32 0.0, %v609
  %v611 = vpop.f32.mrb[0].mxu0
  %v612 = vadd.f32 0.0, %v611
  %v613 = vpop.f32.mrb[0].mxu0
  %v614 = vadd.f32 0.0, %v613
  %615 = vmatprep.mubr.bf16.mxu0 %v435
  %616 = vmatmul.mubr.bf16.gmra.mrb[0].mxu0 %v263
  %v617 = vpop.f32.mrb[0].mxu0
  %v618 = vadd.f32 0.0, %v617
  %v619 = vpop.f32.mrb[0].mxu0
  %v620 = vadd.f32 0.0, %v619
  %v621 = vpop.f32.mrb[0].mxu0
  %v622 = vadd.f32 0.0, %v621
  %v623 = vpop.f32.mrb[0].mxu0
  %v624 = vadd.f32 0.0, %v623
  %625 = vmatprep.mubr.bf16.mxu0 %v438
  %626 = vmatmul.mubr.bf16.gmra.mrb[0].mxu0 %v265
  %v627 = vpop.f32.mrb[0].mxu0
  %v628 = vadd.f32 0.0, %v627
  %v629 = vpop.f32.mrb[0].mxu0
  %v630 = vadd.f32 0.0, %v629
  %v631 = vpop.f32.mrb[0].mxu0
  %v632 = vadd.f32 0.0, %v631
  %v633 = vpop.f32.mrb[0].mxu0
  %v634 = vadd.f32 0.0, %v633
  %635 = vmatprep.mubr.bf16.mxu0 %v441
  %636 = vmatmul.mubr.bf16.gmra.mrb[0].mxu0 %v267
  %v637 = vpop.f32.mrb[0].mxu0
  %v638 = vadd.f32 0.0, %v637
  %v639 = vpop.f32.mrb[0].mxu0
  %v640 = vadd.f32 0.0, %v639
  %v641 = vpop.f32.mrb[0].mxu0
  %v642 = vadd.f32 0.0, %v641
  %v643 = vpop.f32.mrb[0].mxu0
  %v644 = vadd.f32 0.0, %v643
  %645 = vmatprep.mubr.bf16.mxu0 %v444
  %646 = vmatmul.mubr.bf16.gmra.mrb[0].mxu0 %v269
  %v647 = vpop.f32.mrb[0].mxu0
  %v648 = vadd.f32 0.0, %v647
  %v649 = vpop.f32.mrb[0].mxu0
  %v650 = vadd.f32 0.0, %v649
  %v651 = vpop.f32.mrb[0].mxu0
  %v652 = vadd.f32 0.0, %v651
  %v653 = vpop.f32.mrb[0].mxu0
  %v654 = vadd.f32 0.0, %v653
  %655 = vmatprep.mubr.bf16.mxu0 %v447
  %656 = vmatmul.mubr.bf16.gmra.mrb[0].mxu0 %v271
  %v657 = vpop.f32.mrb[0].mxu0
  %v658 = vadd.f32 0.0, %v657
  %v659 = vpop.f32.mrb[0].mxu0
  %v660 = vadd.f32 0.0, %v659
  %v661 = vpop.f32.mrb[0].mxu0
  %v662 = vadd.f32 0.0, %v661
  %v663 = vpop.f32.mrb[0].mxu0
  %v664 = vadd.f32 0.0, %v663
  %665 = vmatprep.mubr.bf16.mxu0 %v450
  %666 = vmatmul.mubr.bf16.gmra.mrb[0].mxu0 %v273
  %v667 = vpop.f32.mrb[0].mxu0
  %v668 = vadd.f32 0.0, %v667
  %v669 = vpop.f32.mrb[0].mxu0
  %v670 = vadd.f32 0.0, %v669
  %v671 = vpop.f32.mrb[0].mxu0
  %v672 = vadd.f32 0.0, %v671
  %v673 = vpop.f32.mrb[0].mxu0
  %v674 = vadd.f32 0.0, %v673
  %675 = vmatprep.mubr.bf16.mxu0 %v453
  %676 = vmatmul.mubr.bf16.gmra.mrb[0].mxu0 %v275
  %v677 = vpop.f32.mrb[0].mxu0
  %v678 = vadd.f32 0.0, %v677
  %v679 = vpop.f32.mrb[0].mxu0
  %v680 = vadd.f32 0.0, %v679
  %v681 = vpop.f32.mrb[0].mxu0
  %v682 = vadd.f32 0.0, %v681
  %v683 = vpop.f32.mrb[0].mxu0
  %v684 = vadd.f32 0.0, %v683
  %685 = vmatprep.mubr.bf16.mxu0 %v456
  %686 = vmatmul.mubr.bf16.gmra.mrb[0].mxu0 %v277
  %v687 = vpop.f32.mrb[0].mxu0
  %v688 = vadd.f32 0.0, %v687
  %v689 = vpop.f32.mrb[0].mxu0
  %v690 = vadd.f32 0.0, %v689
  %v691 = vpop.f32.mrb[0].mxu0
  %v692 = vadd.f32 0.0, %v691
  %v693 = vpop.f32.mrb[0].mxu0
  %v694 = vadd.f32 0.0, %v693
  %695 = vmatprep.mubr.bf16.mxu0 %v459
  %696 = vmatmul.mubr.bf16.gmra.mrb[0].mxu0 %v279
  %v697 = vpop.f32.mrb[0].mxu0
  %v698 = vadd.f32 0.0, %v697
  %v699 = vpop.f32.mrb[0].mxu0
  %v700 = vadd.f32 0.0, %v699
  %v701 = vpop.f32.mrb[0].mxu0
  %v702 = vadd.f32 0.0, %v701
  %v703 = vpop.f32.mrb[0].mxu0
  %v704 = vadd.f32 0.0, %v703
  %705 = vmatprep.mubr.bf16.mxu0 %v462
  %706 = vmatmul.mubr.bf16.gmra.mrb[0].mxu0 %v281
  %v707 = vpop.f32.mrb[0].mxu0
  %v708 = vadd.f32 0.0, %v707
  %v709 = vpop.f32.mrb[0].mxu0
  %v710 = vadd.f32 0.0, %v709
  %v711 = vpop.f32.mrb[0].mxu0
  %v712 = vadd.f32 0.0, %v711
  %v713 = vpop.f32.mrb[0].mxu0
  %v714 = vadd.f32 0.0, %v713
  %715 = vmatprep.mubr.bf16.mxu0 %v465
  %716 = vmatmul.mubr.bf16.gmra.mrb[0].mxu0 %v283
  %v717 = vpop.f32.mrb[0].mxu0
  %v718 = vadd.f32 0.0, %v717
  %v719 = vpop.f32.mrb[0].mxu0
  %v720 = vadd.f32 0.0, %v719
  %v721 = vpop.f32.mrb[0].mxu0
  %v722 = vadd.f32 0.0, %v721
  %v723 = vpop.f32.mrb[0].mxu0
  %v724 = vadd.f32 0.0, %v723
  %725 = vmatprep.mubr.bf16.mxu0 %v468
  %726 = vmatmul.mubr.bf16.gmra.mrb[0].mxu0 %v285
  %v727 = vpop.f32.mrb[0].mxu0
  %v728 = vadd.f32 0.0, %v727
  %v729 = vpop.f32.mrb[0].mxu0
  %v730 = vadd.f32 0.0, %v729
  %v731 = vpop.f32.mrb[0].mxu0
  %v732 = vadd.f32 0.0, %v731
  %v733 = vpop.f32.mrb[0].mxu0
  %v734 = vadd.f32 0.0, %v733
  %735 = vmatprep.mubr.bf16.mxu0 %v471
  %736 = vmatmul.mubr.bf16.gmra.mrb[0].mxu0 %v287
  %v737 = vpop.f32.mrb[0].mxu0
  %v738 = vadd.f32 0.0, %v737
  %v739 = vpop.f32.mrb[0].mxu0
  %v740 = vadd.f32 0.0, %v739
  %v741 = vpop.f32.mrb[0].mxu0
  %v742 = vadd.f32 0.0, %v741
  %v743 = vpop.f32.mrb[0].mxu0
  %v744 = vadd.f32 0.0, %v743
  %745 = vmatprep.mubr.bf16.mxu0 %v474
  %746 = vmatmul.mubr.bf16.gmra.mrb[0].mxu0 %v289
  %v747 = vpop.f32.mrb[0].mxu0
  %v748 = vadd.f32 0.0, %v747
  %v749 = vpop.f32.mrb[0].mxu0
  %v750 = vadd.f32 0.0, %v749
  %v751 = vpop.f32.mrb[0].mxu0
  %v752 = vadd.f32 0.0, %v751
  %v753 = vpop.f32.mrb[0].mxu0
  %v754 = vadd.f32 0.0, %v753
  %755 = vdwg.mxu0
  %v756 = vmax.f32 %v518, %v520
  %v757 = vmax.f32 %v522, %v524
  %v758 = vmax.f32 %v528, %v530
  %v759 = vmax.f32 %v532, %v534
  %v760 = vmax.f32 %v538, %v540
  %v761 = vmax.f32 %v542, %v544
  %v762 = vmax.f32 %v548, %v550
  %v763 = vmax.f32 %v552, %v554
  %v764 = vmax.f32 %v558, %v560
  %v765 = vmax.f32 %v562, %v564
  %v766 = vmax.f32 %v568, %v570
  %v767 = vmax.f32 %v572, %v574
  %v768 = vmax.f32 %v578, %v580
  %v769 = vmax.f32 %v582, %v584
  %v770 = vmax.f32 %v588, %v590
  %v771 = vmax.f32 %v592, %v594
  %v772 = vmax.f32 %v598, %v600
  %v773 = vmax.f32 %v602, %v604
  %v774 = vmax.f32 %v608, %v610
  %v775 = vmax.f32 %v612, %v614
  %v776 = vmax.f32 %v618, %v620
  %v777 = vmax.f32 %v622, %v624
  %v778 = vmax.f32 %v628, %v630
  %v779 = vmax.f32 %v632, %v634
  %v780 = vmax.f32 %v638, %v640
  %v781 = vmax.f32 %v642, %v644
  %v782 = vmax.f32 %v648, %v650
  %v783 = vmax.f32 %v652, %v654
  %v784 = vmax.f32 %v658, %v660
  %v785 = vmax.f32 %v662, %v664
  %v786 = vmax.f32 %v668, %v670
  %v787 = vmax.f32 %v672, %v674
  %v788 = vmax.f32 %v678, %v680
  %v789 = vmax.f32 %v682, %v684
  %v790 = vmax.f32 %v688, %v690
  %v791 = vmax.f32 %v692, %v694
  %v792 = vmax.f32 %v698, %v700
  %v793 = vmax.f32 %v702, %v704
  %v794 = vmax.f32 %v708, %v710
  %v795 = vmax.f32 %v712, %v714
  %v796 = vmax.f32 %v718, %v720
  %v797 = vmax.f32 %v722, %v724
  %v798 = vmax.f32 %v728, %v730
  %v799 = vmax.f32 %v732, %v734
  %v800 = vmax.f32 %v738, %v740
  %v801 = vmax.f32 %v742, %v744
  %v802 = vmax.f32 %v748, %v750
  %v803 = vmax.f32 %v752, %v754
  %v804 = vmax.f32 %v756, %v758
  %v805 = vmax.f32 %v757, %v759
  %v806 = vmax.f32 %v760, %v762
  %v807 = vmax.f32 %v761, %v763
  %v808 = vmax.f32 %v764, %v766
  %v809 = vmax.f32 %v765, %v767
  %v810 = vmax.f32 %v768, %v770
  %v811 = vmax.f32 %v769, %v771
  %v812 = vmax.f32 %v772, %v774
  %v813 = vmax.f32 %v773, %v775
  %v814 = vmax.f32 %v776, %v778
  %v815 = vmax.f32 %v777, %v779
  %v816 = vmax.f32 %v780, %v782
  %v817 = vmax.f32 %v781, %v783
  %v818 = vmax.f32 %v784, %v786
  %v819 = vmax.f32 %v785, %v787
  %v820 = vmax.f32 %v788, %v790
  %v821 = vmax.f32 %v789, %v791
  %v822 = vmax.f32 %v792, %v794
  %v823 = vmax.f32 %v793, %v795
  %v824 = vmax.f32 %v796, %v798
  %v825 = vmax.f32 %v797, %v799
  %v826 = vmax.f32 %v800, %v802
  %v827 = vmax.f32 %v801, %v803
  %v828 = vld [vmem:[%s2] sm:$0x1]
  %v830 = vlaneseq
  %v831 = vshrl.u32 %v830, 7
  %v832 = vsub.s32 0, %v831
  %v833 = vrot.slane %v828, %v832
  %v835 = vadd.f32 %v804, %v833
  %v836 = vadd.f32 %v805, %v833
  %v837 = vadd.f32 %v806, %v833
  %v838 = vadd.f32 %v807, %v833
  %v839 = vadd.f32 %v808, %v833
  %v840 = vadd.f32 %v809, %v833
  %v841 = vadd.f32 %v810, %v833
  %v842 = vadd.f32 %v811, %v833
  %v843 = vadd.f32 %v812, %v833
  %v844 = vadd.f32 %v813, %v833
  %v845 = vadd.f32 %v814, %v833
  %v846 = vadd.f32 %v815, %v833
  %v847 = vadd.f32 %v816, %v833
  %v848 = vadd.f32 %v817, %v833
  %v849 = vadd.f32 %v818, %v833
  %v850 = vadd.f32 %v819, %v833
  %v851 = vadd.f32 %v820, %v833
  %v852 = vadd.f32 %v821, %v833
  %v853 = vadd.f32 %v822, %v833
  %v854 = vadd.f32 %v823, %v833
  %v855 = vadd.f32 %v824, %v833
  %v856 = vadd.f32 %v825, %v833
  %v857 = vadd.f32 %v826, %v833
  %v858 = vadd.f32 %v827, %v833
  %v859 = vmax.f32 %v835, 0.0
  %v860 = vmax.f32 %v836, 0.0
  %v861 = vmax.f32 %v837, 0.0
  %v862 = vmax.f32 %v838, 0.0
  %v863 = vmax.f32 %v839, 0.0
  %v864 = vmax.f32 %v840, 0.0
  %v865 = vmax.f32 %v841, 0.0
  %v866 = vmax.f32 %v842, 0.0
  %v867 = vmax.f32 %v843, 0.0
  %v868 = vmax.f32 %v844, 0.0
  %v869 = vmax.f32 %v845, 0.0
  %v870 = vmax.f32 %v846, 0.0
  %v871 = vmax.f32 %v847, 0.0
  %v872 = vmax.f32 %v848, 0.0
  %v873 = vmax.f32 %v849, 0.0
  %v874 = vmax.f32 %v850, 0.0
  %v875 = vmax.f32 %v851, 0.0
  %v876 = vmax.f32 %v852, 0.0
  %v877 = vmax.f32 %v853, 0.0
  %v878 = vmax.f32 %v854, 0.0
  %v879 = vmax.f32 %v855, 0.0
  %v880 = vmax.f32 %v856, 0.0
  %v881 = vmax.f32 %v857, 0.0
  %v882 = vmax.f32 %v858, 0.0
  %v883 = vpack.c.bf16 %v860, %v859
  %v884 = vpack.c.bf16 %v862, %v861
  %v885 = vpack.c.bf16 %v864, %v863
  %v886 = vpack.c.bf16 %v866, %v865
  %v887 = vpack.c.bf16 %v868, %v867
  %v888 = vpack.c.bf16 %v870, %v869
  %v889 = vpack.c.bf16 %v872, %v871
  %v890 = vpack.c.bf16 %v874, %v873
  %v891 = vpack.c.bf16 %v876, %v875
  %v892 = vpack.c.bf16 %v878, %v877
  %v893 = vpack.c.bf16 %v880, %v879
  %v894 = vpack.c.bf16 %v882, %v881
  %v895 = vld [vmem:[%s3] sm:$0xff]
  %v896 = vld [vmem:[%s3 + $0x8] sm:$0xff]
  %v897 = vld [vmem:[%s3 + $0x10] sm:$0xff]
  %v898 = vld [vmem:[%s3 + $0x18] sm:$0xff]
  %v899 = vld [vmem:[%s3 + $0x20] sm:$0xff]
  %v900 = vld [vmem:[%s3 + $0x28] sm:$0xff]
  %v901 = vld [vmem:[%s3 + $0x30] sm:$0xff]
  %v902 = vld [vmem:[%s3 + $0x38] sm:$0xff]
  %v903 = vld [vmem:[%s3 + $0x40] sm:$0xff]
  %v904 = vld [vmem:[%s3 + $0x48] sm:$0xff]
  %v905 = vld [vmem:[%s3 + $0x50] sm:$0xff]
  %v906 = vld [vmem:[%s3 + $0x58] sm:$0xff]
  %v907 = vld [vmem:[%s3 + $0x60] sm:$0xff]
  %v908 = vld [vmem:[%s3 + $0x68] sm:$0xff]
  %v909 = vld [vmem:[%s3 + $0x70] sm:$0xff]
  %v910 = vld [vmem:[%s3 + $0x78] sm:$0xff]
  %v911 = vld [vmem:[%s3 + $0x80] sm:$0xff]
  %v912 = vld [vmem:[%s3 + $0x88] sm:$0xff]
  %v913 = vld [vmem:[%s3 + $0x90] sm:$0xff]
  %v914 = vld [vmem:[%s3 + $0x98] sm:$0xff]
  %v915 = vld [vmem:[%s3 + $0xa0] sm:$0xff]
  %v916 = vld [vmem:[%s3 + $0xa8] sm:$0xff]
  %v917 = vld [vmem:[%s3 + $0xb0] sm:$0xff]
  %v918 = vld [vmem:[%s3 + $0xb8] sm:$0xff]
  %v919 = vld [vmem:[%s3 + $0xc0] sm:$0xff]
  %v920 = vld [vmem:[%s3 + $0xc8] sm:$0xff]
  %v921 = vld [vmem:[%s3 + $0xd0] sm:$0xff]
  %v922 = vld [vmem:[%s3 + $0xd8] sm:$0xff]
  %v923 = vld [vmem:[%s3 + $0xe0] sm:$0xff]
  %v924 = vld [vmem:[%s3 + $0xe8] sm:$0xff]
  %v925 = vld [vmem:[%s3 + $0xf0] sm:$0xff]
  %v926 = vld [vmem:[%s3 + $0xf8] sm:$0xff]
  %v927 = vld [vmem:[%s3 + $0x100] sm:$0xff]
  %v928 = vld [vmem:[%s3 + $0x108] sm:$0xff]
  %v929 = vld [vmem:[%s3 + $0x110] sm:$0xff]
  %v930 = vld [vmem:[%s3 + $0x118] sm:$0xff]
  %v931 = vld [vmem:[%s3 + $0x120] sm:$0xff]
  %v932 = vld [vmem:[%s3 + $0x128] sm:$0xff]
  %v933 = vld [vmem:[%s3 + $0x130] sm:$0xff]
  %v934 = vld [vmem:[%s3 + $0x138] sm:$0xff]
  %v935 = vld [vmem:[%s3 + $0x140] sm:$0xff]
  %v936 = vld [vmem:[%s3 + $0x148] sm:$0xff]
  %v937 = vld [vmem:[%s3 + $0x150] sm:$0xff]
  %v938 = vld [vmem:[%s3 + $0x158] sm:$0xff]
  %v939 = vld [vmem:[%s3 + $0x160] sm:$0xff]
  %v940 = vld [vmem:[%s3 + $0x168] sm:$0xff]
  %v941 = vld [vmem:[%s3 + $0x170] sm:$0xff]
  %v942 = vld [vmem:[%s3 + $0x178] sm:$0xff]
  %v943 = vld [vmem:[%s3 + $0x180] sm:$0xff]
  %v944 = vld [vmem:[%s3 + $0x188] sm:$0xff]
  %v945 = vld [vmem:[%s3 + $0x190] sm:$0xff]
  %v946 = vld [vmem:[%s3 + $0x198] sm:$0xff]
  %v947 = vld [vmem:[%s3 + $0x1a0] sm:$0xff]
  %v948 = vld [vmem:[%s3 + $0x1a8] sm:$0xff]
  %v949 = vld [vmem:[%s3 + $0x1b0] sm:$0xff]
  %v950 = vld [vmem:[%s3 + $0x1b8] sm:$0xff]
  %v951 = vld [vmem:[%s3 + $0x1c0] sm:$0xff]
  %v952 = vld [vmem:[%s3 + $0x1c8] sm:$0xff]
  %v953 = vld [vmem:[%s3 + $0x1d0] sm:$0xff]
  %v954 = vld [vmem:[%s3 + $0x1d8] sm:$0xff]
  %v955 = vld [vmem:[%s3 + $0x1e0] sm:$0xff]
  %v956 = vld [vmem:[%s3 + $0x1e8] sm:$0xff]
  %v957 = vld [vmem:[%s3 + $0x1f0] sm:$0xff]
  %v958 = vld [vmem:[%s3 + $0x1f8] sm:$0xff]
  %v959 = vld [vmem:[%s3 + $0x200] sm:$0xff]
  %v960 = vld [vmem:[%s3 + $0x208] sm:$0xff]
  %v961 = vld [vmem:[%s3 + $0x210] sm:$0xff]
  %v962 = vld [vmem:[%s3 + $0x218] sm:$0xff]
  %v963 = vld [vmem:[%s3 + $0x220] sm:$0xff]
  %v964 = vld [vmem:[%s3 + $0x228] sm:$0xff]
  %v965 = vld [vmem:[%s3 + $0x230] sm:$0xff]
  %v966 = vld [vmem:[%s3 + $0x238] sm:$0xff]
  %v967 = vld [vmem:[%s3 + $0x240] sm:$0xff]
  %v968 = vld [vmem:[%s3 + $0x248] sm:$0xff]
  %v969 = vld [vmem:[%s3 + $0x250] sm:$0xff]
  %v970 = vld [vmem:[%s3 + $0x258] sm:$0xff]
  %v971 = vld [vmem:[%s3 + $0x260] sm:$0xff]
  %v972 = vld [vmem:[%s3 + $0x268] sm:$0xff]
  %v973 = vld [vmem:[%s3 + $0x270] sm:$0xff]
  %v974 = vld [vmem:[%s3 + $0x278] sm:$0xff]
  %v1055 = vunpack.c.l.b16 %v895
  %v1056 = vunpack.c.h.b16 %v895
  %v1057 = vunpack.c.l.b16 %v896
  %v1058 = vunpack.c.h.b16 %v896
  %v1059 = vunpack.c.l.b16 %v897
  %v1060 = vunpack.c.h.b16 %v897
  %v1061 = vunpack.c.l.b16 %v898
  %v1062 = vunpack.c.h.b16 %v898
  %v1063 = vunpack.c.l.b16 %v899
  %v1064 = vunpack.c.h.b16 %v899
  %v1065 = vunpack.c.l.b16 %v900
  %v1066 = vunpack.c.h.b16 %v900
  %v1067 = vunpack.c.l.b16 %v901
  %v1068 = vunpack.c.h.b16 %v901
  %v1069 = vunpack.c.l.b16 %v902
  %v1070 = vunpack.c.h.b16 %v902
  %v1071 = vunpack.c.l.b16 %v903
  %v1072 = vunpack.c.h.b16 %v903
  %v1073 = vunpack.c.l.b16 %v904
  %v1074 = vunpack.c.h.b16 %v904
  %v1075 = vunpack.c.l.b16 %v905
  %v1076 = vunpack.c.h.b16 %v905
  %v1077 = vunpack.c.l.b16 %v906
  %v1078 = vunpack.c.h.b16 %v906
  %v1079 = vunpack.c.l.b16 %v907
  %v1080 = vunpack.c.h.b16 %v907
  %v1081 = vunpack.c.l.b16 %v908
  %v1082 = vunpack.c.h.b16 %v908
  %v1083 = vunpack.c.l.b16 %v909
  %v1084 = vunpack.c.h.b16 %v909
  %v1085 = vunpack.c.l.b16 %v910
  %v1086 = vunpack.c.h.b16 %v910
  %v1087 = vunpack.c.l.b16 %v911
  %v1088 = vunpack.c.h.b16 %v911
  %v1089 = vunpack.c.l.b16 %v912
  %v1090 = vunpack.c.h.b16 %v912
  %v1091 = vunpack.c.l.b16 %v913
  %v1092 = vunpack.c.h.b16 %v913
  %v1093 = vunpack.c.l.b16 %v914
  %v1094 = vunpack.c.h.b16 %v914
  %v1095 = vunpack.c.l.b16 %v915
  %v1096 = vunpack.c.h.b16 %v915
  %v1097 = vunpack.c.l.b16 %v916
  %v1098 = vunpack.c.h.b16 %v916
  %v1099 = vunpack.c.l.b16 %v917
  %v1100 = vunpack.c.h.b16 %v917
  %v1101 = vunpack.c.l.b16 %v918
  %v1102 = vunpack.c.h.b16 %v918
  %v1103 = vunpack.c.l.b16 %v919
  %v1104 = vunpack.c.h.b16 %v919
  %v1105 = vunpack.c.l.b16 %v920
  %v1106 = vunpack.c.h.b16 %v920
  %v1107 = vunpack.c.l.b16 %v921
  %v1108 = vunpack.c.h.b16 %v921
  %v1109 = vunpack.c.l.b16 %v922
  %v1110 = vunpack.c.h.b16 %v922
  %v1111 = vunpack.c.l.b16 %v923
  %v1112 = vunpack.c.h.b16 %v923
  %v1113 = vunpack.c.l.b16 %v924
  %v1114 = vunpack.c.h.b16 %v924
  %v1115 = vunpack.c.l.b16 %v925
  %v1116 = vunpack.c.h.b16 %v925
  %v1117 = vunpack.c.l.b16 %v926
  %v1118 = vunpack.c.h.b16 %v926
  %v1119 = vunpack.c.l.b16 %v927
  %v1120 = vunpack.c.h.b16 %v927
  %v1121 = vunpack.c.l.b16 %v928
  %v1122 = vunpack.c.h.b16 %v928
  %v1123 = vunpack.c.l.b16 %v929
  %v1124 = vunpack.c.h.b16 %v929
  %v1125 = vunpack.c.l.b16 %v930
  %v1126 = vunpack.c.h.b16 %v930
  %v1127 = vunpack.c.l.b16 %v931
  %v1128 = vunpack.c.h.b16 %v931
  %v1129 = vunpack.c.l.b16 %v932
  %v1130 = vunpack.c.h.b16 %v932
  %v1131 = vunpack.c.l.b16 %v933
  %v1132 = vunpack.c.h.b16 %v933
  %v1133 = vunpack.c.l.b16 %v934
  %v1134 = vunpack.c.h.b16 %v934
  %v1135 = vunpack.c.l.b16 %v935
  %v1136 = vunpack.c.h.b16 %v935
  %v1137 = vunpack.c.l.b16 %v936
  %v1138 = vunpack.c.h.b16 %v936
  %v1139 = vunpack.c.l.b16 %v937
  %v1140 = vunpack.c.h.b16 %v937
  %v1141 = vunpack.c.l.b16 %v938
  %v1142 = vunpack.c.h.b16 %v938
  %v1143 = vunpack.c.l.b16 %v939
  %v1144 = vunpack.c.h.b16 %v939
  %v1145 = vunpack.c.l.b16 %v940
  %v1146 = vunpack.c.h.b16 %v940
  %v1147 = vunpack.c.l.b16 %v941
  %v1148 = vunpack.c.h.b16 %v941
  %v1149 = vunpack.c.l.b16 %v942
  %v1150 = vunpack.c.h.b16 %v942
  %v1151 = vunpack.c.l.b16 %v943
  %v1152 = vunpack.c.h.b16 %v943
  %v1153 = vunpack.c.l.b16 %v944
  %v1154 = vunpack.c.h.b16 %v944
  %v1155 = vunpack.c.l.b16 %v945
  %v1156 = vunpack.c.h.b16 %v945
  %v1157 = vunpack.c.l.b16 %v946
  %v1158 = vunpack.c.h.b16 %v946
  %v1159 = vunpack.c.l.b16 %v947
  %v1160 = vunpack.c.h.b16 %v947
  %v1161 = vunpack.c.l.b16 %v948
  %v1162 = vunpack.c.h.b16 %v948
  %v1163 = vunpack.c.l.b16 %v949
  %v1164 = vunpack.c.h.b16 %v949
  %v1165 = vunpack.c.l.b16 %v950
  %v1166 = vunpack.c.h.b16 %v950
  %v1167 = vunpack.c.l.b16 %v951
  %v1168 = vunpack.c.h.b16 %v951
  %v1169 = vunpack.c.l.b16 %v952
  %v1170 = vunpack.c.h.b16 %v952
  %v1171 = vunpack.c.l.b16 %v953
  %v1172 = vunpack.c.h.b16 %v953
  %v1173 = vunpack.c.l.b16 %v954
  %v1174 = vunpack.c.h.b16 %v954
  %v1175 = vunpack.c.l.b16 %v955
  %v1176 = vunpack.c.h.b16 %v955
  %v1177 = vunpack.c.l.b16 %v956
  %v1178 = vunpack.c.h.b16 %v956
  %v1179 = vunpack.c.l.b16 %v957
  %v1180 = vunpack.c.h.b16 %v957
  %v1181 = vunpack.c.l.b16 %v958
  %v1182 = vunpack.c.h.b16 %v958
  %v1183 = vunpack.c.l.b16 %v959
  %v1184 = vunpack.c.h.b16 %v959
  %v1185 = vunpack.c.l.b16 %v960
  %v1186 = vunpack.c.h.b16 %v960
  %v1187 = vunpack.c.l.b16 %v961
  %v1188 = vunpack.c.h.b16 %v961
  %v1189 = vunpack.c.l.b16 %v962
  %v1190 = vunpack.c.h.b16 %v962
  %v1191 = vunpack.c.l.b16 %v963
  %v1192 = vunpack.c.h.b16 %v963
  %v1193 = vunpack.c.l.b16 %v964
  %v1194 = vunpack.c.h.b16 %v964
  %v1195 = vunpack.c.l.b16 %v965
  %v1196 = vunpack.c.h.b16 %v965
  %v1197 = vunpack.c.l.b16 %v966
  %v1198 = vunpack.c.h.b16 %v966
  %v1199 = vunpack.c.l.b16 %v967
  %v1200 = vunpack.c.h.b16 %v967
  %v1201 = vunpack.c.l.b16 %v968
  %v1202 = vunpack.c.h.b16 %v968
  %v1203 = vunpack.c.l.b16 %v969
  %v1204 = vunpack.c.h.b16 %v969
  %v1205 = vunpack.c.l.b16 %v970
  %v1206 = vunpack.c.h.b16 %v970
  %v1207 = vunpack.c.l.b16 %v971
  %v1208 = vunpack.c.h.b16 %v971
  %v1209 = vunpack.c.l.b16 %v972
  %v1210 = vunpack.c.h.b16 %v972
  %v1211 = vunpack.c.l.b16 %v973
  %v1212 = vunpack.c.h.b16 %v973
  %v1213 = vunpack.c.l.b16 %v974
  %v1214 = vunpack.c.h.b16 %v974
  %v1215 = vpack.c.b16 %v1057, %v1055
  %v1216 = vpack.c.b16 %v1058, %v1056
  %v1217 = vpack.c.b16 %v1061, %v1059
  %v1218 = vpack.c.b16 %v1062, %v1060
  %v1219 = vpack.c.b16 %v1065, %v1063
  %v1220 = vpack.c.b16 %v1066, %v1064
  %v1221 = vpack.c.b16 %v1069, %v1067
  %v1222 = vpack.c.b16 %v1070, %v1068
  %v1223 = vpack.c.b16 %v1073, %v1071
  %v1224 = vpack.c.b16 %v1074, %v1072
  %v1225 = vpack.c.b16 %v1077, %v1075
  %v1226 = vpack.c.b16 %v1078, %v1076
  %v1227 = vpack.c.b16 %v1081, %v1079
  %v1228 = vpack.c.b16 %v1082, %v1080
  %v1229 = vpack.c.b16 %v1085, %v1083
  %v1230 = vpack.c.b16 %v1086, %v1084
  %v1231 = vpack.c.b16 %v1089, %v1087
  %v1232 = vpack.c.b16 %v1090, %v1088
  %v1233 = vpack.c.b16 %v1093, %v1091
  %v1234 = vpack.c.b16 %v1094, %v1092
  %v1235 = vpack.c.b16 %v1097, %v1095
  %v1236 = vpack.c.b16 %v1098, %v1096
  %v1237 = vpack.c.b16 %v1101, %v1099
  %v1238 = vpack.c.b16 %v1102, %v1100
  %v1239 = vpack.c.b16 %v1105, %v1103
  %v1240 = vpack.c.b16 %v1106, %v1104
  %v1241 = vpack.c.b16 %v1109, %v1107
  %v1242 = vpack.c.b16 %v1110, %v1108
  %v1243 = vpack.c.b16 %v1113, %v1111
  %v1244 = vpack.c.b16 %v1114, %v1112
  %v1245 = vpack.c.b16 %v1117, %v1115
  %v1246 = vpack.c.b16 %v1118, %v1116
  %v1247 = vpack.c.b16 %v1121, %v1119
  %v1248 = vpack.c.b16 %v1122, %v1120
  %v1249 = vpack.c.b16 %v1125, %v1123
  %v1250 = vpack.c.b16 %v1126, %v1124
  %v1251 = vpack.c.b16 %v1129, %v1127
  %v1252 = vpack.c.b16 %v1130, %v1128
  %v1253 = vpack.c.b16 %v1133, %v1131
  %v1254 = vpack.c.b16 %v1134, %v1132
  %v1255 = vpack.c.b16 %v1137, %v1135
  %v1256 = vpack.c.b16 %v1138, %v1136
  %v1257 = vpack.c.b16 %v1141, %v1139
  %v1258 = vpack.c.b16 %v1142, %v1140
  %v1259 = vpack.c.b16 %v1145, %v1143
  %v1260 = vpack.c.b16 %v1146, %v1144
  %v1261 = vpack.c.b16 %v1149, %v1147
  %v1262 = vpack.c.b16 %v1150, %v1148
  %v1263 = vpack.c.b16 %v1153, %v1151
  %v1264 = vpack.c.b16 %v1154, %v1152
  %v1265 = vpack.c.b16 %v1157, %v1155
  %v1266 = vpack.c.b16 %v1158, %v1156
  %v1267 = vpack.c.b16 %v1161, %v1159
  %v1268 = vpack.c.b16 %v1162, %v1160
  %v1269 = vpack.c.b16 %v1165, %v1163
  %v1270 = vpack.c.b16 %v1166, %v1164
  %v1271 = vpack.c.b16 %v1169, %v1167
  %v1272 = vpack.c.b16 %v1170, %v1168
  %v1273 = vpack.c.b16 %v1173, %v1171
  %v1274 = vpack.c.b16 %v1174, %v1172
  %v1275 = vpack.c.b16 %v1177, %v1175
  %v1276 = vpack.c.b16 %v1178, %v1176
  %v1277 = vpack.c.b16 %v1181, %v1179
  %v1278 = vpack.c.b16 %v1182, %v1180
  %v1279 = vpack.c.b16 %v1185, %v1183
  %v1280 = vpack.c.b16 %v1186, %v1184
  %v1281 = vpack.c.b16 %v1189, %v1187
  %v1282 = vpack.c.b16 %v1190, %v1188
  %v1283 = vpack.c.b16 %v1193, %v1191
  %v1284 = vpack.c.b16 %v1194, %v1192
  %v1285 = vpack.c.b16 %v1197, %v1195
  %v1286 = vpack.c.b16 %v1198, %v1196
  %v1287 = vpack.c.b16 %v1201, %v1199
  %v1288 = vpack.c.b16 %v1202, %v1200
  %v1289 = vpack.c.b16 %v1205, %v1203
  %v1290 = vpack.c.b16 %v1206, %v1204
  %v1291 = vpack.c.b16 %v1209, %v1207
  %v1292 = vpack.c.b16 %v1210, %v1208
  %v1293 = vpack.c.b16 %v1213, %v1211
  %v1294 = vpack.c.b16 %v1214, %v1212
  %1375 = vmatprep.subr.bf16.mxu0 %v1216
  %1376 = vmatpush1.bf16.msra.mxu0 %v1215
  %1377 = vmatprep.subr.bf16.mxu0 %v1218
  %1378 = vmatpush1.bf16.msra.mxu0 %v1217
  %1379 = vmatprep.subr.bf16.mxu0 %v1220
  %1380 = vmatpush1.bf16.msra.mxu0 %v1219
  %1381 = vmatprep.subr.bf16.mxu0 %v1222
  %1382 = vmatpush1.bf16.msra.mxu0 %v1221
  %1383 = vmatprep.subr.bf16.mxu0 %v1224
  %1384 = vmatpush1.bf16.msra.mxu0 %v1223
  %1385 = vmatprep.subr.bf16.mxu0 %v1226
  %1386 = vmatpush1.bf16.msra.mxu0 %v1225
  %1387 = vmatprep.subr.bf16.mxu0 %v1228
  %1388 = vmatpush1.bf16.msra.mxu0 %v1227
  %1389 = vmatprep.subr.bf16.mxu0 %v1230
  %1390 = vmatpush1.bf16.msra.mxu0 %v1229
  %1391 = vmatprep.subr.bf16.mxu0 %v1232
  %1392 = vmatpush1.bf16.msra.mxu0 %v1231
  %1393 = vmatprep.subr.bf16.mxu0 %v1234
  %1394 = vmatpush1.bf16.msra.mxu0 %v1233
  %1395 = vmatprep.subr.bf16.mxu0 %v1236
  %1396 = vmatpush1.bf16.msra.mxu0 %v1235
  %1397 = vmatprep.subr.bf16.mxu0 %v1238
  %1398 = vmatpush1.bf16.msra.mxu0 %v1237
  %1399 = vmatprep.subr.bf16.mxu0 %v1240
  %1400 = vmatpush1.bf16.msra.mxu0 %v1239
  %1401 = vmatprep.subr.bf16.mxu0 %v1242
  %1402 = vmatpush1.bf16.msra.mxu0 %v1241
  %1403 = vmatprep.subr.bf16.mxu0 %v1244
  %1404 = vmatpush1.bf16.msra.mxu0 %v1243
  %1405 = vmatprep.subr.bf16.mxu0 %v1246
  %1406 = vmatpush1.bf16.msra.mxu0 %v1245
  %1407 = vmatprep.mubr.bf16.mxu0 %v884
  %1408 = vmatmul.mubr.bf16.gmra.mrb[0].mxu0 %v883
  %v1409 = vpop.f32.mrb[0].mxu0
  %v1410 = vadd.f32 0.0, %v1409
  %v1411 = vpop.f32.mrb[0].mxu0
  %v1412 = vadd.f32 0.0, %v1411
  %v1413 = vpop.f32.mrb[0].mxu0
  %v1414 = vadd.f32 0.0, %v1413
  %v1415 = vpop.f32.mrb[0].mxu0
  %v1416 = vadd.f32 0.0, %v1415
  %1417 = vmatprep.mubr.bf16.mxu0 %v885
  %1418 = vmatmul.mubr.bf16.gmra.mrb[0].mxu0 %v884
  %v1419 = vpop.f32.mrb[0].mxu0
  %v1420 = vadd.f32 0.0, %v1419
  %v1421 = vpop.f32.mrb[0].mxu0
  %v1422 = vadd.f32 0.0, %v1421
  %v1423 = vpop.f32.mrb[0].mxu0
  %v1424 = vadd.f32 0.0, %v1423
  %v1425 = vpop.f32.mrb[0].mxu0
  %v1426 = vadd.f32 0.0, %v1425
  %1427 = vmatprep.mubr.bf16.mxu0 %v886
  %1428 = vmatmul.mubr.bf16.gmra.mrb[0].mxu0 %v885
  %v1429 = vpop.f32.mrb[0].mxu0
  %v1430 = vadd.f32 0.0, %v1429
  %v1431 = vpop.f32.mrb[0].mxu0
  %v1432 = vadd.f32 0.0, %v1431
  %v1433 = vpop.f32.mrb[0].mxu0
  %v1434 = vadd.f32 0.0, %v1433
  %v1435 = vpop.f32.mrb[0].mxu0
  %v1436 = vadd.f32 0.0, %v1435
  %1437 = vmatprep.mubr.bf16.mxu0 %v887
  %1438 = vmatmul.mubr.bf16.gmra.mrb[0].mxu0 %v886
  %v1439 = vpop.f32.mrb[0].mxu0
  %v1440 = vadd.f32 0.0, %v1439
  %v1441 = vpop.f32.mrb[0].mxu0
  %v1442 = vadd.f32 0.0, %v1441
  %v1443 = vpop.f32.mrb[0].mxu0
  %v1444 = vadd.f32 0.0, %v1443
  %v1445 = vpop.f32.mrb[0].mxu0
  %v1446 = vadd.f32 0.0, %v1445
  %1447 = vmatprep.mubr.bf16.mxu0 %v888
  %1448 = vmatmul.mubr.bf16.gmra.mrb[0].mxu0 %v887
  %v1449 = vpop.f32.mrb[0].mxu0
  %v1450 = vadd.f32 0.0, %v1449
  %v1451 = vpop.f32.mrb[0].mxu0
  %v1452 = vadd.f32 0.0, %v1451
  %v1453 = vpop.f32.mrb[0].mxu0
  %v1454 = vadd.f32 0.0, %v1453
  %v1455 = vpop.f32.mrb[0].mxu0
  %v1456 = vadd.f32 0.0, %v1455
  %1457 = vmatprep.mubr.bf16.mxu0 %v889
  %1458 = vmatmul.mubr.bf16.gmra.mrb[0].mxu0 %v888
  %v1459 = vpop.f32.mrb[0].mxu0
  %v1460 = vadd.f32 0.0, %v1459
  %v1461 = vpop.f32.mrb[0].mxu0
  %v1462 = vadd.f32 0.0, %v1461
  %v1463 = vpop.f32.mrb[0].mxu0
  %v1464 = vadd.f32 0.0, %v1463
  %v1465 = vpop.f32.mrb[0].mxu0
  %v1466 = vadd.f32 0.0, %v1465
  %1467 = vmatprep.mubr.bf16.mxu0 %v890
  %1468 = vmatmul.mubr.bf16.gmra.mrb[0].mxu0 %v889
  %v1469 = vpop.f32.mrb[0].mxu0
  %v1470 = vadd.f32 0.0, %v1469
  %v1471 = vpop.f32.mrb[0].mxu0
  %v1472 = vadd.f32 0.0, %v1471
  %v1473 = vpop.f32.mrb[0].mxu0
  %v1474 = vadd.f32 0.0, %v1473
  %v1475 = vpop.f32.mrb[0].mxu0
  %v1476 = vadd.f32 0.0, %v1475
  %1477 = vmatprep.mubr.bf16.mxu0 %v891
  %1478 = vmatmul.mubr.bf16.gmra.mrb[0].mxu0 %v890
  %v1479 = vpop.f32.mrb[0].mxu0
  %v1480 = vadd.f32 0.0, %v1479
  %v1481 = vpop.f32.mrb[0].mxu0
  %v1482 = vadd.f32 0.0, %v1481
  %v1483 = vpop.f32.mrb[0].mxu0
  %v1484 = vadd.f32 0.0, %v1483
  %v1485 = vpop.f32.mrb[0].mxu0
  %v1486 = vadd.f32 0.0, %v1485
  %1487 = vdwg.mxu0
  %1488 = vmatprep.subr.bf16.mxu0 %v1248
  %1489 = vmatpush1.bf16.msra.mxu0 %v1247
  %1490 = vmatprep.subr.bf16.mxu0 %v1250
  %1491 = vmatpush1.bf16.msra.mxu0 %v1249
  %1492 = vmatprep.subr.bf16.mxu0 %v1252
  %1493 = vmatpush1.bf16.msra.mxu0 %v1251
  %1494 = vmatprep.subr.bf16.mxu0 %v1254
  %1495 = vmatpush1.bf16.msra.mxu0 %v1253
  %1496 = vmatprep.subr.bf16.mxu0 %v1256
  %1497 = vmatpush1.bf16.msra.mxu0 %v1255
  %1498 = vmatprep.subr.bf16.mxu0 %v1258
  %1499 = vmatpush1.bf16.msra.mxu0 %v1257
  %1500 = vmatprep.subr.bf16.mxu0 %v1260
  %1501 = vmatpush1.bf16.msra.mxu0 %v1259
  %1502 = vmatprep.subr.bf16.mxu0 %v1262
  %1503 = vmatpush1.bf16.msra.mxu0 %v1261
  %1504 = vmatprep.subr.bf16.mxu0 %v1264
  %1505 = vmatpush1.bf16.msra.mxu0 %v1263
  %1506 = vmatprep.subr.bf16.mxu0 %v1266
  %1507 = vmatpush1.bf16.msra.mxu0 %v1265
  %1508 = vmatprep.subr.bf16.mxu0 %v1268
  %1509 = vmatpush1.bf16.msra.mxu0 %v1267
  %1510 = vmatprep.subr.bf16.mxu0 %v1270
  %1511 = vmatpush1.bf16.msra.mxu0 %v1269
  %1512 = vmatprep.subr.bf16.mxu0 %v1272
  %1513 = vmatpush1.bf16.msra.mxu0 %v1271
  %1514 = vmatprep.subr.bf16.mxu0 %v1274
  %1515 = vmatpush1.bf16.msra.mxu0 %v1273
  %1516 = vmatprep.subr.bf16.mxu0 %v1276
  %1517 = vmatpush1.bf16.msra.mxu0 %v1275
  %1518 = vmatprep.subr.bf16.mxu0 %v1278
  %1519 = vmatpush1.bf16.msra.mxu0 %v1277
  %1520 = vmatprep.mubr.bf16.mxu0 %v886
  %1521 = vmatmul.mubr.bf16.gmra.mrb[0].mxu0 %v885
  %v1522 = vpop.f32.mrb[0].mxu0
  %v1523 = vadd.f32 %v1410, %v1522
  %v1524 = vpop.f32.mrb[0].mxu0
  %v1525 = vadd.f32 %v1412, %v1524
  %v1526 = vpop.f32.mrb[0].mxu0
  %v1527 = vadd.f32 %v1414, %v1526
  %v1528 = vpop.f32.mrb[0].mxu0
  %v1529 = vadd.f32 %v1416, %v1528
  %1530 = vmatprep.mubr.bf16.mxu0 %v887
  %1531 = vmatmul.mubr.bf16.gmra.mrb[0].mxu0 %v886
  %v1532 = vpop.f32.mrb[0].mxu0
  %v1533 = vadd.f32 %v1420, %v1532
  %v1534 = vpop.f32.mrb[0].mxu0
  %v1535 = vadd.f32 %v1422, %v1534
  %v1536 = vpop.f32.mrb[0].mxu0
  %v1537 = vadd.f32 %v1424, %v1536
  %v1538 = vpop.f32.mrb[0].mxu0
  %v1539 = vadd.f32 %v1426, %v1538
  %1540 = vmatprep.mubr.bf16.mxu0 %v888
  %1541 = vmatmul.mubr.bf16.gmra.mrb[0].mxu0 %v887
  %v1542 = vpop.f32.mrb[0].mxu0
  %v1543 = vadd.f32 %v1430, %v1542
  %v1544 = vpop.f32.mrb[0].mxu0
  %v1545 = vadd.f32 %v1432, %v1544
  %v1546 = vpop.f32.mrb[0].mxu0
  %v1547 = vadd.f32 %v1434, %v1546
  %v1548 = vpop.f32.mrb[0].mxu0
  %v1549 = vadd.f32 %v1436, %v1548
  %1550 = vmatprep.mubr.bf16.mxu0 %v889
  %1551 = vmatmul.mubr.bf16.gmra.mrb[0].mxu0 %v888
  %v1552 = vpop.f32.mrb[0].mxu0
  %v1553 = vadd.f32 %v1440, %v1552
  %v1554 = vpop.f32.mrb[0].mxu0
  %v1555 = vadd.f32 %v1442, %v1554
  %v1556 = vpop.f32.mrb[0].mxu0
  %v1557 = vadd.f32 %v1444, %v1556
  %v1558 = vpop.f32.mrb[0].mxu0
  %v1559 = vadd.f32 %v1446, %v1558
  %1560 = vmatprep.mubr.bf16.mxu0 %v890
  %1561 = vmatmul.mubr.bf16.gmra.mrb[0].mxu0 %v889
  %v1562 = vpop.f32.mrb[0].mxu0
  %v1563 = vadd.f32 %v1450, %v1562
  %v1564 = vpop.f32.mrb[0].mxu0
  %v1565 = vadd.f32 %v1452, %v1564
  %v1566 = vpop.f32.mrb[0].mxu0
  %v1567 = vadd.f32 %v1454, %v1566
  %v1568 = vpop.f32.mrb[0].mxu0
  %v1569 = vadd.f32 %v1456, %v1568
  %1570 = vmatprep.mubr.bf16.mxu0 %v891
  %1571 = vmatmul.mubr.bf16.gmra.mrb[0].mxu0 %v890
  %v1572 = vpop.f32.mrb[0].mxu0
  %v1573 = vadd.f32 %v1460, %v1572
  %v1574 = vpop.f32.mrb[0].mxu0
  %v1575 = vadd.f32 %v1462, %v1574
  %v1576 = vpop.f32.mrb[0].mxu0
  %v1577 = vadd.f32 %v1464, %v1576
  %v1578 = vpop.f32.mrb[0].mxu0
  %v1579 = vadd.f32 %v1466, %v1578
  %1580 = vmatprep.mubr.bf16.mxu0 %v892
  %1581 = vmatmul.mubr.bf16.gmra.mrb[0].mxu0 %v891
  %v1582 = vpop.f32.mrb[0].mxu0
  %v1583 = vadd.f32 %v1470, %v1582
  %v1584 = vpop.f32.mrb[0].mxu0
  %v1585 = vadd.f32 %v1472, %v1584
  %v1586 = vpop.f32.mrb[0].mxu0
  %v1587 = vadd.f32 %v1474, %v1586
  %v1588 = vpop.f32.mrb[0].mxu0
  %v1589 = vadd.f32 %v1476, %v1588
  %1590 = vmatprep.mubr.bf16.mxu0 %v893
  %1591 = vmatmul.mubr.bf16.gmra.mrb[0].mxu0 %v892
  %v1592 = vpop.f32.mrb[0].mxu0
  %v1593 = vadd.f32 %v1480, %v1592
  %v1594 = vpop.f32.mrb[0].mxu0
  %v1595 = vadd.f32 %v1482, %v1594
  %v1596 = vpop.f32.mrb[0].mxu0
  %v1597 = vadd.f32 %v1484, %v1596
  %v1598 = vpop.f32.mrb[0].mxu0
  %v1599 = vadd.f32 %v1486, %v1598
  %1600 = vdwg.mxu0
  %1601 = vmatprep.subr.bf16.mxu0 %v1280
  %1602 = vmatpush1.bf16.msra.mxu0 %v1279
  %1603 = vmatprep.subr.bf16.mxu0 %v1282
  %1604 = vmatpush1.bf16.msra.mxu0 %v1281
  %1605 = vmatprep.subr.bf16.mxu0 %v1284
  %1606 = vmatpush1.bf16.msra.mxu0 %v1283
  %1607 = vmatprep.subr.bf16.mxu0 %v1286
  %1608 = vmatpush1.bf16.msra.mxu0 %v1285
  %1609 = vmatprep.subr.bf16.mxu0 %v1288
  %1610 = vmatpush1.bf16.msra.mxu0 %v1287
  %1611 = vmatprep.subr.bf16.mxu0 %v1290
  %1612 = vmatpush1.bf16.msra.mxu0 %v1289
  %1613 = vmatprep.subr.bf16.mxu0 %v1292
  %1614 = vmatpush1.bf16.msra.mxu0 %v1291
  %1615 = vmatprep.subr.bf16.mxu0 %v1294
  %1616 = vmatpush1.bf16.msra.mxu0 %v1293
  %1617 = vmatprep.subr.bf16.mxu0 0
  %1618 = vmatpush1.bf16.msra.mxu0 0
  %1619 = vmatprep.subr.bf16.mxu0 0
  %1620 = vmatpush1.bf16.msra.mxu0 0
  %1621 = vmatprep.subr.bf16.mxu0 0
  %1622 = vmatpush1.bf16.msra.mxu0 0
  %1623 = vmatprep.subr.bf16.mxu0 0
  %1624 = vmatpush1.bf16.msra.mxu0 0
  %1625 = vmatprep.subr.bf16.mxu0 0
  %1626 = vmatpush1.bf16.msra.mxu0 0
  %1627 = vmatprep.subr.bf16.mxu0 0
  %1628 = vmatpush1.bf16.msra.mxu0 0
  %1629 = vmatprep.subr.bf16.mxu0 0
  %1630 = vmatpush1.bf16.msra.mxu0 0
  %1631 = vmatprep.subr.bf16.mxu0 0
  %1632 = vmatpush1.bf16.msra.mxu0 0
  %1633 = vmatprep.mubr.bf16.mxu0 0
  %1634 = vmatmul.mubr.bf16.gmra.mrb[0].mxu0 %v887
  %v1635 = vpop.f32.mrb[0].mxu0
  %v1636 = vadd.f32 %v1523, %v1635
  %v1637 = vpop.f32.mrb[0].mxu0
  %v1638 = vadd.f32 %v1525, %v1637
  %v1639 = vpop.f32.mrb[0].mxu0
  %v1640 = vadd.f32 %v1527, %v1639
  %v1641 = vpop.f32.mrb[0].mxu0
  %v1642 = vadd.f32 %v1529, %v1641
  %1643 = vmatprep.mubr.bf16.mxu0 0
  %1644 = vmatmul.mubr.bf16.gmra.mrb[0].mxu0 %v888
  %v1645 = vpop.f32.mrb[0].mxu0
  %v1646 = vadd.f32 %v1533, %v1645
  %v1647 = vpop.f32.mrb[0].mxu0
  %v1648 = vadd.f32 %v1535, %v1647
  %v1649 = vpop.f32.mrb[0].mxu0
  %v1650 = vadd.f32 %v1537, %v1649
  %v1651 = vpop.f32.mrb[0].mxu0
  %v1652 = vadd.f32 %v1539, %v1651
  %1653 = vmatprep.mubr.bf16.mxu0 0
  %1654 = vmatmul.mubr.bf16.gmra.mrb[0].mxu0 %v889
  %v1655 = vpop.f32.mrb[0].mxu0
  %v1656 = vadd.f32 %v1543, %v1655
  %v1657 = vpop.f32.mrb[0].mxu0
  %v1658 = vadd.f32 %v1545, %v1657
  %v1659 = vpop.f32.mrb[0].mxu0
  %v1660 = vadd.f32 %v1547, %v1659
  %v1661 = vpop.f32.mrb[0].mxu0
  %v1662 = vadd.f32 %v1549, %v1661
  %1663 = vmatprep.mubr.bf16.mxu0 0
  %1664 = vmatmul.mubr.bf16.gmra.mrb[0].mxu0 %v890
  %v1665 = vpop.f32.mrb[0].mxu0
  %v1666 = vadd.f32 %v1553, %v1665
  %v1667 = vpop.f32.mrb[0].mxu0
  %v1668 = vadd.f32 %v1555, %v1667
  %v1669 = vpop.f32.mrb[0].mxu0
  %v1670 = vadd.f32 %v1557, %v1669
  %v1671 = vpop.f32.mrb[0].mxu0
  %v1672 = vadd.f32 %v1559, %v1671
  %1673 = vmatprep.mubr.bf16.mxu0 0
  %1674 = vmatmul.mubr.bf16.gmra.mrb[0].mxu0 %v891
  %v1675 = vpop.f32.mrb[0].mxu0
  %v1676 = vadd.f32 %v1563, %v1675
  %v1677 = vpop.f32.mrb[0].mxu0
  %v1678 = vadd.f32 %v1565, %v1677
  %v1679 = vpop.f32.mrb[0].mxu0
  %v1680 = vadd.f32 %v1567, %v1679
  %v1681 = vpop.f32.mrb[0].mxu0
  %v1682 = vadd.f32 %v1569, %v1681
  %1683 = vmatprep.mubr.bf16.mxu0 0
  %1684 = vmatmul.mubr.bf16.gmra.mrb[0].mxu0 %v892
  %v1685 = vpop.f32.mrb[0].mxu0
  %v1686 = vadd.f32 %v1573, %v1685
  %v1687 = vpop.f32.mrb[0].mxu0
  %v1688 = vadd.f32 %v1575, %v1687
  %v1689 = vpop.f32.mrb[0].mxu0
  %v1690 = vadd.f32 %v1577, %v1689
  %v1691 = vpop.f32.mrb[0].mxu0
  %v1692 = vadd.f32 %v1579, %v1691
  %1693 = vmatprep.mubr.bf16.mxu0 0
  %1694 = vmatmul.mubr.bf16.gmra.mrb[0].mxu0 %v893
  %v1695 = vpop.f32.mrb[0].mxu0
  %v1696 = vadd.f32 %v1583, %v1695
  %v1697 = vpop.f32.mrb[0].mxu0
  %v1698 = vadd.f32 %v1585, %v1697
  %v1699 = vpop.f32.mrb[0].mxu0
  %v1700 = vadd.f32 %v1587, %v1699
  %v1701 = vpop.f32.mrb[0].mxu0
  %v1702 = vadd.f32 %v1589, %v1701
  %1703 = vmatprep.mubr.bf16.mxu0 0
  %1704 = vmatmul.mubr.bf16.gmra.mrb[0].mxu0 %v894
  %v1705 = vpop.f32.mrb[0].mxu0
  %v1706 = vadd.f32 %v1593, %v1705
  %v1707 = vpop.f32.mrb[0].mxu0
  %v1708 = vadd.f32 %v1595, %v1707
  %v1709 = vpop.f32.mrb[0].mxu0
  %v1710 = vadd.f32 %v1597, %v1709
  %v1711 = vpop.f32.mrb[0].mxu0
  %v1712 = vadd.f32 %v1599, %v1711
  %1713 = vdwg.mxu0
  %v1714 = vmax.f32 %v1636, %v1638
  %v1715 = vmax.f32 %v1640, %v1642
  %v1716 = vmax.f32 %v1646, %v1648
  %v1717 = vmax.f32 %v1650, %v1652
  %v1718 = vmax.f32 %v1656, %v1658
  %v1719 = vmax.f32 %v1660, %v1662
  %v1720 = vmax.f32 %v1666, %v1668
  %v1721 = vmax.f32 %v1670, %v1672
  %v1722 = vmax.f32 %v1676, %v1678
  %v1723 = vmax.f32 %v1680, %v1682
  %v1724 = vmax.f32 %v1686, %v1688
  %v1725 = vmax.f32 %v1690, %v1692
  %v1726 = vmax.f32 %v1696, %v1698
  %v1727 = vmax.f32 %v1700, %v1702
  %v1728 = vmax.f32 %v1706, %v1708
  %v1729 = vmax.f32 %v1710, %v1712
  %v1730 = vmax.f32 %v1714, %v1716
  %v1731 = vmax.f32 %v1715, %v1717
  %v1732 = vmax.f32 %v1718, %v1720
  %v1733 = vmax.f32 %v1719, %v1721
  %v1734 = vmax.f32 %v1722, %v1724
  %v1735 = vmax.f32 %v1723, %v1725
  %v1736 = vmax.f32 %v1726, %v1728
  %v1737 = vmax.f32 %v1727, %v1729
  %v1738 = vld [vmem:[%s4] sm:$0x1]
  %v1740 = vlaneseq
  %v1741 = vshrl.u32 %v1740, 7
  %v1742 = vsub.s32 0, %v1741
  %v1743 = vrot.slane %v1738, %v1742
  %v1745 = vadd.f32 %v1730, %v1743
  %v1746 = vadd.f32 %v1731, %v1743
  %v1747 = vadd.f32 %v1732, %v1743
  %v1748 = vadd.f32 %v1733, %v1743
  %v1749 = vadd.f32 %v1734, %v1743
  %v1750 = vadd.f32 %v1735, %v1743
  %v1751 = vadd.f32 %v1736, %v1743
  %v1752 = vadd.f32 %v1737, %v1743
  %v1753 = vmax.f32 %v1745, 0.0
  %v1754 = vmax.f32 %v1746, 0.0
  %v1755 = vmax.f32 %v1747, 0.0
  %v1756 = vmax.f32 %v1748, 0.0
  %v1757 = vmax.f32 %v1749, 0.0
  %v1758 = vmax.f32 %v1750, 0.0
  %v1759 = vmax.f32 %v1751, 0.0
  %v1760 = vmax.f32 %v1752, 0.0
  %v1761 = vld [vmem:[%s5] sm:$0xff]
  %v1762 = vld [vmem:[%s5 + $0x8] sm:$0xff]
  %v1763 = vld [vmem:[%s5 + $0x10] sm:$0xff]
  %v1764 = vld [vmem:[%s5 + $0x18] sm:$0xff]
  %v1765 = vld [vmem:[%s5 + $0x20] sm:$0xff]
  %v1766 = vld [vmem:[%s5 + $0x28] sm:$0xff]
  %v1767 = vld [vmem:[%s5 + $0x30] sm:$0xff]
  %v1768 = vld [vmem:[%s5 + $0x38] sm:$0xff]
  %v1769 = vld [vmem:[%s5 + $0x40] sm:$0xff]
  %v1770 = vld [vmem:[%s5 + $0x48] sm:$0xff]
  %v1771 = vld [vmem:[%s5 + $0x50] sm:$0xff]
  %v1772 = vld [vmem:[%s5 + $0x58] sm:$0xff]
  %v1773 = vld [vmem:[%s5 + $0x60] sm:$0xff]
  %v1774 = vld [vmem:[%s5 + $0x68] sm:$0xff]
  %v1775 = vld [vmem:[%s5 + $0x70] sm:$0xff]
  %v1776 = vld [vmem:[%s5 + $0x78] sm:$0xff]
  %v1777 = vld [vmem:[%s5 + $0x80] sm:$0xff]
  %v1778 = vld [vmem:[%s5 + $0x88] sm:$0xff]
  %v1779 = vld [vmem:[%s5 + $0x90] sm:$0xff]
  %v1780 = vld [vmem:[%s5 + $0x98] sm:$0xff]
  %v1781 = vld [vmem:[%s5 + $0xa0] sm:$0xff]
  %v1782 = vld [vmem:[%s5 + $0xa8] sm:$0xff]
  %v1783 = vld [vmem:[%s5 + $0xb0] sm:$0xff]
  %v1784 = vld [vmem:[%s5 + $0xb8] sm:$0xff]
  %v1785 = vld [vmem:[%s5 + $0xc0] sm:$0xff]
  %v1786 = vld [vmem:[%s5 + $0xc8] sm:$0xff]
  %v1787 = vld [vmem:[%s5 + $0xd0] sm:$0xff]
  %v1788 = vld [vmem:[%s5 + $0xd8] sm:$0xff]
  %v1789 = vld [vmem:[%s5 + $0xe0] sm:$0xff]
  %v1790 = vld [vmem:[%s5 + $0xe8] sm:$0xff]
  %v1791 = vld [vmem:[%s5 + $0xf0] sm:$0xff]
  %v1792 = vld [vmem:[%s5 + $0xf8] sm:$0xff]
  %v1793 = vld [vmem:[%s5 + $0x100] sm:$0xff]
  %v1794 = vld [vmem:[%s5 + $0x108] sm:$0xff]
  %v1795 = vld [vmem:[%s5 + $0x110] sm:$0xff]
  %v1796 = vld [vmem:[%s5 + $0x118] sm:$0xff]
  %v1797 = vld [vmem:[%s5 + $0x120] sm:$0xff]
  %v1798 = vld [vmem:[%s5 + $0x128] sm:$0xff]
  %v1799 = vld [vmem:[%s5 + $0x130] sm:$0xff]
  %v1800 = vld [vmem:[%s5 + $0x138] sm:$0xff]
  %v1801 = vld [vmem:[%s5 + $0x140] sm:$0xff]
  %v1802 = vld [vmem:[%s5 + $0x148] sm:$0xff]
  %v1803 = vld [vmem:[%s5 + $0x150] sm:$0xff]
  %v1804 = vld [vmem:[%s5 + $0x158] sm:$0xff]
  %v1805 = vld [vmem:[%s5 + $0x160] sm:$0xff]
  %v1806 = vld [vmem:[%s5 + $0x168] sm:$0xff]
  %v1807 = vld [vmem:[%s5 + $0x170] sm:$0xff]
  %v1808 = vld [vmem:[%s5 + $0x178] sm:$0xff]
  %v1809 = vld [vmem:[%s5 + $0x180] sm:$0xff]
  %v1810 = vld [vmem:[%s5 + $0x188] sm:$0xff]
  %v1811 = vld [vmem:[%s5 + $0x190] sm:$0xff]
  %v1812 = vld [vmem:[%s5 + $0x198] sm:$0xff]
  %v1813 = vld [vmem:[%s5 + $0x1a0] sm:$0xff]
  %v1814 = vld [vmem:[%s5 + $0x1a8] sm:$0xff]
  %v1815 = vld [vmem:[%s5 + $0x1b0] sm:$0xff]
  %v1816 = vld [vmem:[%s5 + $0x1b8] sm:$0xff]
  %v1817 = vld [vmem:[%s5 + $0x1c0] sm:$0xff]
  %v1818 = vld [vmem:[%s5 + $0x1c8] sm:$0xff]
  %v1819 = vld [vmem:[%s5 + $0x1d0] sm:$0xff]
  %v1820 = vld [vmem:[%s5 + $0x1d8] sm:$0xff]
  %v1821 = vld [vmem:[%s5 + $0x1e0] sm:$0xff]
  %v1822 = vld [vmem:[%s5 + $0x1e8] sm:$0xff]
  %v1823 = vld [vmem:[%s5 + $0x1f0] sm:$0xff]
  %v1824 = vld [vmem:[%s5 + $0x1f8] sm:$0xff]
  %v1825 = vld [vmem:[%s6] sm:$0x1]
  %v1827 = vlaneseq
  %v1828 = vshrl.u32 %v1827, 7
  %v1829 = vsub.s32 0, %v1828
  %v1830 = vrot.slane %v1825, %v1829
  %1832 = vmatprep.subr.mxu0 0.0
  %1833 = vmatpush1.msra.mxu0 %v1761
  %1834 = vmatprep.subr.mxu0 0.0
  %1835 = vmatpush1.msra.mxu0 %v1762
  %1836 = vmatprep.subr.mxu0 0.0
  %1837 = vmatpush1.msra.mxu0 %v1763
  %1838 = vmatprep.subr.mxu0 0.0
  %1839 = vmatpush1.msra.mxu0 %v1764
  %1840 = vmatprep.subr.mxu0 0.0
  %1841 = vmatpush1.msra.mxu0 %v1765
  %1842 = vmatprep.subr.mxu0 0.0
  %1843 = vmatpush1.msra.mxu0 %v1766
  %1844 = vmatprep.subr.mxu0 0.0
  %1845 = vmatpush1.msra.mxu0 %v1767
  %1846 = vmatprep.subr.mxu0 0.0
  %1847 = vmatpush1.msra.mxu0 %v1768
  %1848 = vmatprep.subr.mxu0 0.0
  %1849 = vmatpush1.msra.mxu0 %v1769
  %1850 = vmatprep.subr.mxu0 0.0
  %1851 = vmatpush1.msra.mxu0 %v1770
  %1852 = vmatprep.subr.mxu0 0.0
  %1853 = vmatpush1.msra.mxu0 %v1771
  %1854 = vmatprep.subr.mxu0 0.0
  %1855 = vmatpush1.msra.mxu0 %v1772
  %1856 = vmatprep.subr.mxu0 0.0
  %1857 = vmatpush1.msra.mxu0 %v1773
  %1858 = vmatprep.subr.mxu0 0.0
  %1859 = vmatpush1.msra.mxu0 %v1774
  %1860 = vmatprep.subr.mxu0 0.0
  %1861 = vmatpush1.msra.mxu0 %v1775
  %1862 = vmatprep.subr.mxu0 0.0
  %1863 = vmatpush1.msra.mxu0 %v1776
  %1864 = vmatprep.subr.mxu0 0.0
  %1865 = vmatpush1.msra.mxu0 %v1777
  %1866 = vmatprep.subr.mxu0 0.0
  %1867 = vmatpush1.msra.mxu0 %v1778
  %1868 = vmatprep.subr.mxu0 0.0
  %1869 = vmatpush1.msra.mxu0 %v1779
  %1870 = vmatprep.subr.mxu0 0.0
  %1871 = vmatpush1.msra.mxu0 %v1780
  %1872 = vmatprep.subr.mxu0 0.0
  %1873 = vmatpush1.msra.mxu0 %v1781
  %1874 = vmatprep.subr.mxu0 0.0
  %1875 = vmatpush1.msra.mxu0 %v1782
  %1876 = vmatprep.subr.mxu0 0.0
  %1877 = vmatpush1.msra.mxu0 %v1783
  %1878 = vmatprep.subr.mxu0 0.0
  %1879 = vmatpush1.msra.mxu0 %v1784
  %1880 = vmatprep.subr.mxu0 0.0
  %1881 = vmatpush1.msra.mxu0 %v1785
  %1882 = vmatprep.subr.mxu0 0.0
  %1883 = vmatpush1.msra.mxu0 %v1786
  %1884 = vmatprep.subr.mxu0 0.0
  %1885 = vmatpush1.msra.mxu0 %v1787
  %1886 = vmatprep.subr.mxu0 0.0
  %1887 = vmatpush1.msra.mxu0 %v1788
  %1888 = vmatprep.subr.mxu0 0.0
  %1889 = vmatpush1.msra.mxu0 %v1789
  %1890 = vmatprep.subr.mxu0 0.0
  %1891 = vmatpush1.msra.mxu0 %v1790
  %1892 = vmatprep.subr.mxu0 0.0
  %1893 = vmatpush1.msra.mxu0 %v1791
  %1894 = vmatprep.subr.mxu0 0.0
  %1895 = vmatpush1.msra.mxu0 %v1792
  %1896 = vmatprep.mubr.f32.mxu0 %v1755
  %1897 = vmatmul.mubr.f32.gmra.mrb[0].mxu0 %v1753
  %v1898 = vpop.f32.mrb[0].mxu0
  %v1899 = vadd.f32 %v1830, %v1898
  %v1900 = vpop.f32.mrb[0].mxu0
  %1901 = vmatprep.mubr.f32.mxu0 %v1756
  %1902 = vmatmul.mubr.f32.gmra.mrb[0].mxu0 %v1754
  %v1903 = vpop.f32.mrb[0].mxu0
  %v1904 = vadd.f32 %v1830, %v1903
  %v1905 = vpop.f32.mrb[0].mxu0
  %1906 = vdwg.mxu0
  %1907 = vmatprep.subr.mxu0 0.0
  %1908 = vmatpush1.msra.mxu0 %v1793
  %1909 = vmatprep.subr.mxu0 0.0
  %1910 = vmatpush1.msra.mxu0 %v1794
  %1911 = vmatprep.subr.mxu0 0.0
  %1912 = vmatpush1.msra.mxu0 %v1795
  %1913 = vmatprep.subr.mxu0 0.0
  %1914 = vmatpush1.msra.mxu0 %v1796
  %1915 = vmatprep.subr.mxu0 0.0
  %1916 = vmatpush1.msra.mxu0 %v1797
  %1917 = vmatprep.subr.mxu0 0.0
  %1918 = vmatpush1.msra.mxu0 %v1798
  %1919 = vmatprep.subr.mxu0 0.0
  %1920 = vmatpush1.msra.mxu0 %v1799
  %1921 = vmatprep.subr.mxu0 0.0
  %1922 = vmatpush1.msra.mxu0 %v1800
  %1923 = vmatprep.subr.mxu0 0.0
  %1924 = vmatpush1.msra.mxu0 %v1801
  %1925 = vmatprep.subr.mxu0 0.0
  %1926 = vmatpush1.msra.mxu0 %v1802
  %1927 = vmatprep.subr.mxu0 0.0
  %1928 = vmatpush1.msra.mxu0 %v1803
  %1929 = vmatprep.subr.mxu0 0.0
  %1930 = vmatpush1.msra.mxu0 %v1804
  %1931 = vmatprep.subr.mxu0 0.0
  %1932 = vmatpush1.msra.mxu0 %v1805
  %1933 = vmatprep.subr.mxu0 0.0
  %1934 = vmatpush1.msra.mxu0 %v1806
  %1935 = vmatprep.subr.mxu0 0.0
  %1936 = vmatpush1.msra.mxu0 %v1807
  %1937 = vmatprep.subr.mxu0 0.0
  %1938 = vmatpush1.msra.mxu0 %v1808
  %1939 = vmatprep.subr.mxu0 0.0
  %1940 = vmatpush1.msra.mxu0 %v1809
  %1941 = vmatprep.subr.mxu0 0.0
  %1942 = vmatpush1.msra.mxu0 %v1810
  %1943 = vmatprep.subr.mxu0 0.0
  %1944 = vmatpush1.msra.mxu0 %v1811
  %1945 = vmatprep.subr.mxu0 0.0
  %1946 = vmatpush1.msra.mxu0 %v1812
  %1947 = vmatprep.subr.mxu0 0.0
  %1948 = vmatpush1.msra.mxu0 %v1813
  %1949 = vmatprep.subr.mxu0 0.0
  %1950 = vmatpush1.msra.mxu0 %v1814
  %1951 = vmatprep.subr.mxu0 0.0
  %1952 = vmatpush1.msra.mxu0 %v1815
  %1953 = vmatprep.subr.mxu0 0.0
  %1954 = vmatpush1.msra.mxu0 %v1816
  %1955 = vmatprep.subr.mxu0 0.0
  %1956 = vmatpush1.msra.mxu0 %v1817
  %1957 = vmatprep.subr.mxu0 0.0
  %1958 = vmatpush1.msra.mxu0 %v1818
  %1959 = vmatprep.subr.mxu0 0.0
  %1960 = vmatpush1.msra.mxu0 %v1819
  %1961 = vmatprep.subr.mxu0 0.0
  %1962 = vmatpush1.msra.mxu0 %v1820
  %1963 = vmatprep.subr.mxu0 0.0
  %1964 = vmatpush1.msra.mxu0 %v1821
  %1965 = vmatprep.subr.mxu0 0.0
  %1966 = vmatpush1.msra.mxu0 %v1822
  %1967 = vmatprep.subr.mxu0 0.0
  %1968 = vmatpush1.msra.mxu0 %v1823
  %1969 = vmatprep.subr.mxu0 0.0
  %1970 = vmatpush1.msra.mxu0 %v1824
  %1971 = vmatprep.mubr.f32.mxu0 %v1759
  %1972 = vmatmul.mubr.f32.gmra.mrb[0].mxu0 %v1757
  %v1973 = vpop.f32.mrb[0].mxu0
  %v1974 = vadd.f32 %v1899, %v1973
  %v1975 = vpop.f32.mrb[0].mxu0
  %1976 = vmatprep.mubr.f32.mxu0 %v1760
  %1977 = vmatmul.mubr.f32.gmra.mrb[0].mxu0 %v1758
  %v1978 = vpop.f32.mrb[0].mxu0
  %v1979 = vadd.f32 %v1904, %v1978
  %v1980 = vpop.f32.mrb[0].mxu0
  %1981 = vdwg.mxu0
  %v1982 = vmax.f32 %v1974, 0.0
  %v1983 = vmax.f32 %v1979, 0.0
  %v1984 = vld [vmem:[%s7] sm:$0xff]
  %v1985 = vld [vmem:[%s7 + $0x8] sm:$0xff]
  %v1986 = vld [vmem:[%s7 + $0x10] sm:$0xff]
  %v1987 = vld [vmem:[%s7 + $0x18] sm:$0xff]
  %v1988 = vld [vmem:[%s7 + $0x20] sm:$0xff]
  %v1989 = vld [vmem:[%s7 + $0x28] sm:$0xff]
  %v1990 = vld [vmem:[%s7 + $0x30] sm:$0xff]
  %v1991 = vld [vmem:[%s7 + $0x38] sm:$0xff]
  %v1992 = vld [vmem:[%s7 + $0x40] sm:$0xff]
  %v1993 = vld [vmem:[%s7 + $0x48] sm:$0xff]
  %v1994 = vld [vmem:[%s7 + $0x50] sm:$0xff]
  %v1995 = vld [vmem:[%s7 + $0x58] sm:$0xff]
  %v1996 = vld [vmem:[%s7 + $0x60] sm:$0xff]
  %v1997 = vld [vmem:[%s7 + $0x68] sm:$0xff]
  %v1998 = vld [vmem:[%s7 + $0x70] sm:$0xff]
  %v1999 = vld [vmem:[%s7 + $0x78] sm:$0xff]
  %v2000 = vld [vmem:[%s8] sm:$0x1]
  %v2002 = vlaneseq
  %v2003 = vshrl.u32 %v2002, 7
  %v2004 = vsub.s32 0, %v2003
  %v2005 = vrot.slane %v2000, %v2004
  %2007 = vmatprep.subr.mxu0 0.0
  %2008 = vmatpush1.msra.mxu0 %v1984
  %2009 = vmatprep.subr.mxu0 0.0
  %2010 = vmatpush1.msra.mxu0 %v1985
  %2011 = vmatprep.subr.mxu0 0.0
  %2012 = vmatpush1.msra.mxu0 %v1986
  %2013 = vmatprep.subr.mxu0 0.0
  %2014 = vmatpush1.msra.mxu0 %v1987
  %2015 = vmatprep.subr.mxu0 0.0
  %2016 = vmatpush1.msra.mxu0 %v1988
  %2017 = vmatprep.subr.mxu0 0.0
  %2018 = vmatpush1.msra.mxu0 %v1989
  %2019 = vmatprep.subr.mxu0 0.0
  %2020 = vmatpush1.msra.mxu0 %v1990
  %2021 = vmatprep.subr.mxu0 0.0
  %2022 = vmatpush1.msra.mxu0 %v1991
  %2023 = vmatprep.subr.mxu0 0.0
  %2024 = vmatpush1.msra.mxu0 %v1992
  %2025 = vmatprep.subr.mxu0 0.0
  %2026 = vmatpush1.msra.mxu0 %v1993
  %2027 = vmatprep.subr.mxu0 0.0
  %2028 = vmatpush1.msra.mxu0 %v1994
  %2029 = vmatprep.subr.mxu0 0.0
  %2030 = vmatpush1.msra.mxu0 %v1995
  %2031 = vmatprep.subr.mxu0 0.0
  %2032 = vmatpush1.msra.mxu0 %v1996
  %2033 = vmatprep.subr.mxu0 0.0
  %2034 = vmatpush1.msra.mxu0 %v1997
  %2035 = vmatprep.subr.mxu0 0.0
  %2036 = vmatpush1.msra.mxu0 %v1998
  %2037 = vmatprep.subr.mxu0 0.0
  %2038 = vmatpush1.msra.mxu0 %v1999
  %2039 = vmatprep.subr.mxu0 0.0
  %2040 = vmatpush1.msra.mxu0 0.0
  %2041 = vmatprep.subr.mxu0 0.0
  %2042 = vmatpush1.msra.mxu0 0.0
  %2043 = vmatprep.subr.mxu0 0.0
  %2044 = vmatpush1.msra.mxu0 0.0
  %2045 = vmatprep.subr.mxu0 0.0
  %2046 = vmatpush1.msra.mxu0 0.0
  %2047 = vmatprep.subr.mxu0 0.0
  %2048 = vmatpush1.msra.mxu0 0.0
  %2049 = vmatprep.subr.mxu0 0.0
  %2050 = vmatpush1.msra.mxu0 0.0
  %2051 = vmatprep.subr.mxu0 0.0
  %2052 = vmatpush1.msra.mxu0 0.0
  %2053 = vmatprep.subr.mxu0 0.0
  %2054 = vmatpush1.msra.mxu0 0.0
  %2055 = vmatprep.subr.mxu0 0.0
  %2056 = vmatpush1.msra.mxu0 0.0
  %2057 = vmatprep.subr.mxu0 0.0
  %2058 = vmatpush1.msra.mxu0 0.0
  %2059 = vmatprep.subr.mxu0 0.0
  %2060 = vmatpush1.msra.mxu0 0.0
  %2061 = vmatprep.subr.mxu0 0.0
  %2062 = vmatpush1.msra.mxu0 0.0
  %2063 = vmatprep.subr.mxu0 0.0
  %2064 = vmatpush1.msra.mxu0 0.0
  %2065 = vmatprep.subr.mxu0 0.0
  %2066 = vmatpush1.msra.mxu0 0.0
  %2067 = vmatprep.subr.mxu0 0.0
  %2068 = vmatpush1.msra.mxu0 0.0
  %2069 = vmatprep.subr.mxu0 0.0
  %2070 = vmatpush1.msra.mxu0 0.0
  %2071 = vmatprep.mubr.f32.mxu0 0.0
  %2072 = vmatmul.mubr.f32.gmra.mrb[0].mxu0 %v1982
  %v2073 = vpop.f32.mrb[0].mxu0
  %v2074 = vadd.f32 %v2005, %v2073
  %v2075 = vpop.f32.mrb[0].mxu0
  %2076 = vmatprep.mubr.f32.mxu0 0.0
  %2077 = vmatmul.mubr.f32.gmra.mrb[0].mxu0 %v1983
  %v2078 = vpop.f32.mrb[0].mxu0
  %v2079 = vadd.f32 %v2005, %v2078
  %v2080 = vpop.f32.mrb[0].mxu0
  %2081 = vdwg.mxu0
  %2082 = vmax.xlane.f32.xlu0 %v2074
  %v2083 = vpop.xlane.xlu0 %2082
  %2084 = vmax.xlane.f32.xlu0 %v2079
  %v2085 = vpop.xlane.xlu0 %2084
  %v2086 = vsub.f32 %v2074, %v2083
  %v2087 = vsub.f32 %v2079, %v2085
  %v2088 = vmul.f32 %v2086, 1.442695
  %v2089 = vpow.pop %v2088
  %v2090 = vmul.f32 %v2087, 1.442695
  %v2091 = vpow.pop %v2090
  %2092 = vadd.xlane.f32.xlu0 %v2089
  %v2093 = vpop.xlane.xlu0 %2092
  %2094 = vadd.xlane.f32.xlu0 %v2091
  %v2095 = vpop.xlane.xlu0 %2094
  %v2096 = vrcp.pop %v2093
  %v2097 = vrcp.pop %v2095
  %v2098 = vmul.f32 %v2089, %v2096
  %v2099 = vmul.f32 %v2091, %v2097
  %2100 = vst [vmem:[%s9] sm:$0xff] %v2098
  %2101 = vst [vmem:[%s9 + $0x8] sm:$0xff] %v2099
  // Predicated region
  $region38: #{_forward.1} parent=0 // pred_check
    _
  $region39: #{_forward.1} parent=0 // pred_check_branch
    %2103 = sbr.rel (0) target = $region41
  $region40: #{_forward.1} parent=0 // pred_region
    _
  $region41: #{_forward.1} parent=0 // pred_fallthru
    _
  // Predicated region
  $region42: #{_forward.1} parent=0 // pred_check
    _
  $region43: #{_forward.1} parent=0 // pred_check_branch
    %2105 = sbr.rel (0) target = $region45
  $region44: #{_forward.1} parent=0 // pred_region
    _
  $region45: #{_forward.1} parent=0 // pred_fallthru
    _

</llo_original>
